<compile_context>
chip_gen: v5e
topology: v5e:2x2
jax: 0.10.0
libtpu: 0.0.40
codegen_flags: <defaults>
</compile_context>

<pallas_src>
import numpy as np
import jax
import jax.numpy as jnp
from jax.experimental import pallas as pl
from jax.experimental.pallas import tpu as pltpu

# ---- problem sizes (consistent with the module's forward) ----
B, C, H, W = 2, 4, 8, 8          # x_T: [B, C, H, W] (NCHW, like PyTorch)
HW = H * W
BHW = B * HW                     # 128 pixels -> exactly one lane width
HID = 128                        # hidden width of the synthetic eps-model
T_STEPS = 8                      # number of diffusion steps
BETA_1, BETA_T = 1e-4, 2e-2
LANE = 128                       # lane padding for the time-embedding table


def _make_coefs(beta_1, beta_T, T):
    """Replicates the buffers registered in __init__ (float64, like .double())."""
    betas = np.linspace(beta_1, beta_T, T, dtype=np.float64)
    alphas = 1.0 - betas
    alphas_bar = np.cumprod(alphas)
    alphas_bar_prev = np.concatenate([[1.0], alphas_bar[:-1]])
    sqrt_recip_alphas_bar = np.sqrt(1.0 / alphas_bar)
    sqrt_recipm1_alphas_bar = np.sqrt(1.0 / alphas_bar - 1.0)
    posterior_var = betas * (1.0 - alphas_bar_prev) / (1.0 - alphas_bar)
    pmc1 = np.sqrt(alphas_bar_prev) * betas / (1.0 - alphas_bar)
    pmc2 = np.sqrt(alphas) * (1.0 - alphas_bar_prev) / (1.0 - alphas_bar)
    # var_type == 'fixedlarge'
    model_log_var = np.log(np.concatenate([posterior_var[1:2], betas[1:]]))
    return np.stack([sqrt_recip_alphas_bar, sqrt_recipm1_alphas_bar,
                     pmc1, pmc2, model_log_var], axis=1)        # (T, 5) float64


def _make_sampler_kernel(a_coef, b_coef, sigma, n_steps):
    """a/b/sigma are per-timestep Python-float constants (folded coefficients)."""
    two_c = 2 * C

    def kernel(x_init_ref,   # (2C, BHW)       x_T replicated (T-half rows 0..C-1)
               w1_ref,       # (2*HID, 2C)     block-diag [w1_T^T ; w1_S^T]
               w2_ref,       # (2C, 2*HID)     block-diag [w2_T^T ; w2_S^T]
               te_ref,       # (2*HID, 128)    column t = [temb_T[t]; temb_S[t]]
               noise_ref,    # (T*2C, BHW)     per-step noise rows (zero at t==0)
               out_ref):     # (2C, BHW)       clipped x_0
        x = x_init_ref[...]                                   # one dense vreg
        for step in range(n_steps):                           # reversed(range(T))
            t = n_steps - 1 - step
            # fused T/S eps-model: one MXU matmul per layer (block-diag weights)
            h = jnp.dot(w1_ref[...], x, preferred_element_type=jnp.float32)
            h = jnp.maximum(h + te_ref[:, t:t + 1], 0.0)      # (2*HID, BHW)
            eps = jnp.dot(w2_ref[...], h, preferred_element_type=jnp.float32)
            # x0   = sra*x - srm1a*eps
            # mean = pmc1*x0 + pmc2*x  = a*x - b*eps      (folded host-side)
            # x   <- mean + sigma * noise[t]
            noise_t = noise_ref[pl.ds(t * two_c, two_c), :]   # static row slice
            x = a_coef[t] * x - b_coef[t] * eps + sigma[t] * noise_t
        out_ref[...] = jnp.clip(x, -1.0, 1.0)

    return kernel


def gaussian_diffusion_joint_sample(x_T, model_params, noise_nchw, coefs_np):
    """x_T: [B, C, H, W].  noise_nchw: [T, B, C, H, W] (one randn_like(x_T)/step)."""
    w1t, w2t, tet, w1s, w2s, tes = model_params

    # ---- host-side layout plumbing: channels on sublanes, pixels on lanes ----
    x_half = jnp.transpose(x_T, (1, 0, 2, 3)).reshape(C, BHW).astype(jnp.float32)
    x_init = jnp.concatenate([x_half, x_half], axis=0)            # torch.cat([x_T, x_T])

    # block-diagonal fused weights: one MXU matmul per layer covers both models
    w1_blk = jnp.zeros((2 * HID, 2 * C), jnp.float32)
    w1_blk = w1_blk.at[:HID, :C].set(w1t.T).at[HID:, C:].set(w1s.T)
    w2_blk = jnp.zeros((2 * C, 2 * HID), jnp.float32)
    w2_blk = w2_blk.at[:C, :HID].set(w2t.T).at[C:, HID:].set(w2s.T)

    # time embeddings as a lane-padded column table (dense DMA, cheap column read)
    te_tab = jnp.zeros((2 * HID, LANE), jnp.float32)
    te_tab = te_tab.at[:, :T_STEPS].set(jnp.concatenate([tet, tes], axis=1).T)

    # per-step noise, same draw for both halves (torch.cat([noise, noise])),
    # zeroed at t == 0 (no noise on the final reverse step); flattened to 2-D
    noise_half = jnp.transpose(noise_nchw, (0, 2, 1, 3, 4)).reshape(T_STEPS, C, BHW)
    noise_cat = jnp.concatenate([noise_half, noise_half], axis=1).astype(jnp.float32)
    noise_cat = noise_cat.at[0].set(0.0)                          # (T, 2C, BHW)
    noise_flat = noise_cat.reshape(T_STEPS * 2 * C, BHW)          # (T*2C, BHW)

    # fold per-step scalars (extract(...) with uniform t) into compile-time consts
    sra, srm1a, pmc1, pmc2, mlv = (coefs_np[:, i] for i in range(5))
    a_coef = [float(v) for v in (pmc1 * sra + pmc2)]   # coefficient of x_t
    b_coef = [float(v) for v in (pmc1 * srm1a)]        # coefficient of eps
    sigma = [float(v) for v in np.exp(0.5 * mlv)]      # fixedlarge std-dev

    kernel = _make_sampler_kernel(a_coef, b_coef, sigma, T_STEPS)
    vmem = pl.BlockSpec(memory_space=pltpu.MemorySpace.VMEM)
    out = pl.pallas_call(
        kernel,
        out_shape=jax.ShapeDtypeStruct((2 * C, BHW), jnp.float32),
        in_specs=[vmem, vmem, vmem, vmem, vmem],
        out_specs=vmem,
        compiler_params=pltpu.CompilerParams(vmem_limit_bytes=32 * 1024 * 1024),
    )(x_init, w1_blk, w2_blk, te_tab, noise_flat)

    # (2C, BHW) -> NCHW [2B, C, H, W]  (T half first, then S half, like torch.cat)
    out = out.reshape(2, C, B, H, W)
    return jnp.transpose(out, (0, 2, 1, 3, 4)).reshape(2 * B, C, H, W)


def _reference(x_T, coefs_np, w1t, w2t, tet, w1s, w2s, tes, noise_nchw):
    """Pure-JAX replica in the original per-pixel (BHW, C) orientation."""
    x = jnp.transpose(x_T, (0, 2, 3, 1)).reshape(BHW, C)
    xt, xs = x, x
    for step in range(T_STEPS):
        t = T_STEPS - 1 - step
        eps_t = jnp.maximum(xt @ w1t + tet[t], 0.0) @ w2t
        eps_s = jnp.maximum(xs @ w1s + tes[t], 0.0) @ w2s
        sra, srm1a, pmc1, pmc2, mlv = (float(coefs_np[t, i]) for i in range(5))
        sig = float(np.exp(0.5 * mlv))
        if t > 0:
            n = jnp.transpose(noise_nchw[t], (0, 2, 3, 1)).reshape(BHW, C)
        else:
            n = 0.0

        def upd(xh, eps):
            x0 = sra * xh - srm1a * eps
            mean = pmc1 * x0 + pmc2 * xh
            return mean + sig * n

        xt, xs = upd(xt, eps_t), upd(xs, eps_s)
    xt = jnp.clip(xt, -1.0, 1.0)
    xs = jnp.clip(xs, -1.0, 1.0)

    def to_nchw(xh):
        return jnp.transpose(xh.reshape(B, H, W, C), (0, 3, 1, 2))

    return jnp.concatenate([to_nchw(xt), to_nchw(xs)], axis=0)


if __name__ == "__main__":
    key = jax.random.PRNGKey(0)
    k = jax.random.split(key, 8)

    x_T = jax.random.normal(k[0], (B, C, H, W), jnp.float32)

    # deterministic synthetic model parameters (T_model / S_model)
    w1t = jax.random.normal(k[1], (C, HID), jnp.float32) / np.sqrt(C)
    w2t = jax.random.normal(k[2], (HID, C), jnp.float32) / np.sqrt(HID)
    tet = jax.random.normal(k[3], (T_STEPS, HID), jnp.float32) * 0.1
    w1s = jax.random.normal(k[4], (C, HID), jnp.float32) / np.sqrt(C)
    w2s = jax.random.normal(k[5], (HID, C), jnp.float32) / np.sqrt(HID)
    tes = jax.random.normal(k[6], (T_STEPS, HID), jnp.float32) * 0.1

    # pre-generated per-step noise (one randn_like(x_T) per timestep)
    noise_nchw = jax.random.normal(k[7], (T_STEPS, B, C, H, W), jnp.float32)

    coefs_np = _make_coefs(BETA_1, BETA_T, T_STEPS)
    params = (w1t, w2t, tet, w1s, w2s, tes)

    out = gaussian_diffusion_joint_sample(x_T, params, noise_nchw, coefs_np)
    out = jax.block_until_ready(out)
    assert out.shape == (2 * B, C, H, W)

    ref = _reference(x_T, coefs_np, w1t, w2t, tet, w1s, w2s, tes, noise_nchw)
    np.testing.assert_allclose(np.asarray(out), np.asarray(ref), rtol=2e-3, atol=2e-3)
    print("KERNEL_OK")
</pallas_src>

<mosaic_0001>
module attributes {stable_mosaic.version = 11 : i64} {
  func.func @kernel(%arg0: memref<8x128xf32, #tpu.memory_space<vmem>>, %arg1: memref<256x8xf32, #tpu.memory_space<vmem>>, %arg2: memref<8x256xf32, #tpu.memory_space<vmem>>, %arg3: memref<256x128xf32, #tpu.memory_space<vmem>>, %arg4: memref<64x128xf32, #tpu.memory_space<vmem>>, %arg5: memref<8x128xf32, #tpu.memory_space<vmem>>) attributes {dimension_semantics = [], scalar_prefetch = 0 : i64, scratch_operands = 0 : i64, tpu.core_type = #tpu.core_type<tc>} {
    %c0 = arith.constant 0 : index
    %c0_0 = arith.constant 0 : index
    %0 = vector.load %arg0[%c0, %c0_0] : memref<8x128xf32, #tpu.memory_space<vmem>>, vector<8x128xf32>
    %c0_1 = arith.constant 0 : index
    %c0_2 = arith.constant 0 : index
    %1 = vector.load %arg1[%c0_1, %c0_2] : memref<256x8xf32, #tpu.memory_space<vmem>>, vector<256x8xf32>
    %cst = arith.constant dense<0.000000e+00> : vector<256x128xf32>
    %2 = tpu.matmul %1, %0, %cst {dimension_numbers = #tpu.dot_dimension_numbers<[1], [0], [0], [1], [0, 0, 1, 1], [], []>} : vector<256x8xf32>, vector<8x128xf32>, vector<256x128xf32> -> vector<256x128xf32>
    %c0_3 = arith.constant 0 : index
    %c7 = arith.constant 7 : index
    %3 = vector.load %arg3[%c0_3, %c7] : memref<256x128xf32, #tpu.memory_space<vmem>>, vector<256x1xf32>
    %4 = vector.broadcast %3 : vector<256x1xf32> to vector<256x128xf32>
    %5 = arith.addf %2, %4 : vector<256x128xf32>
    %cst_4 = arith.constant 0.000000e+00 : f32
    %6 = vector.broadcast %cst_4 : f32 to vector<256x128xf32>
    %7 = arith.maximumf %5, %6 : vector<256x128xf32>
    %c0_5 = arith.constant 0 : index
    %c0_6 = arith.constant 0 : index
    %8 = vector.load %arg2[%c0_5, %c0_6] : memref<8x256xf32, #tpu.memory_space<vmem>>, vector<8x256xf32>
    %cst_7 = arith.constant dense<0.000000e+00> : vector<8x128xf32>
    %9 = tpu.matmul %8, %7, %cst_7 {dimension_numbers = #tpu.dot_dimension_numbers<[1], [0], [0], [1], [0, 0, 1, 1], [], []>} : vector<8x256xf32>, vector<256x128xf32>, vector<8x128xf32> -> vector<8x128xf32>
    %c56 = arith.constant 56 : index
    %c0_8 = arith.constant 0 : index
    %10 = vector.load %arg4[%c56, %c0_8] : memref<64x128xf32, #tpu.memory_space<vmem>>, vector<8x128xf32>
    %cst_9 = arith.constant 1.01015258 : f32
    %11 = vector.broadcast %cst_9 : f32 to vector<8x128xf32>
    %12 = arith.mulf %11, %0 : vector<8x128xf32>
    %cst_10 = arith.constant 0.0724371299 : f32
    %13 = vector.broadcast %cst_10 : f32 to vector<8x128xf32>
    %14 = arith.mulf %13, %9 : vector<8x128xf32>
    %15 = arith.subf %12, %14 : vector<8x128xf32>
    %cst_11 = arith.constant 0.141421363 : f32
    %16 = vector.broadcast %cst_11 : f32 to vector<8x128xf32>
    %17 = arith.mulf %16, %10 : vector<8x128xf32>
    %18 = arith.addf %15, %17 : vector<8x128xf32>
    %c0_12 = arith.constant 0 : index
    %c0_13 = arith.constant 0 : index
    %19 = vector.load %arg1[%c0_12, %c0_13] : memref<256x8xf32, #tpu.memory_space<vmem>>, vector<256x8xf32>
    %cst_14 = arith.constant dense<0.000000e+00> : vector<256x128xf32>
    %20 = tpu.matmul %19, %18, %cst_14 {dimension_numbers = #tpu.dot_dimension_numbers<[1], [0], [0], [1], [0, 0, 1, 1], [], []>} : vector<256x8xf32>, vector<8x128xf32>, vector<256x128xf32> -> vector<256x128xf32>
    %c0_15 = arith.constant 0 : index
    %c6 = arith.constant 6 : index
    %21 = vector.load %arg3[%c0_15, %c6] : memref<256x128xf32, #tpu.memory_space<vmem>>, vector<256x1xf32>
    %22 = vector.broadcast %21 : vector<256x1xf32> to vector<256x128xf32>
    %23 = arith.addf %20, %22 : vector<256x128xf32>
    %cst_16 = arith.constant 0.000000e+00 : f32
    %24 = vector.broadcast %cst_16 : f32 to vector<256x128xf32>
    %25 = arith.maximumf %23, %24 : vector<256x128xf32>
    %c0_17 = arith.constant 0 : index
    %c0_18 = arith.constant 0 : index
    %26 = vector.load %arg2[%c0_17, %c0_18] : memref<8x256xf32, #tpu.memory_space<vmem>>, vector<8x256xf32>
    %cst_19 = arith.constant dense<0.000000e+00> : vector<8x128xf32>
    %27 = tpu.matmul %26, %25, %cst_19 {dimension_numbers = #tpu.dot_dimension_numbers<[1], [0], [0], [1], [0, 0, 1, 1], [], []>} : vector<8x256xf32>, vector<256x128xf32>, vector<8x128xf32> -> vector<8x128xf32>
    %c48 = arith.constant 48 : index
    %c0_20 = arith.constant 0 : index
    %28 = vector.load %arg4[%c48, %c0_20] : memref<64x128xf32, #tpu.memory_space<vmem>>, vector<8x128xf32>
    %cst_21 = arith.constant 1.0086906 : f32
    %29 = vector.broadcast %cst_21 : f32 to vector<8x128xf32>
    %30 = arith.mulf %29, %18 : vector<8x128xf32>
    %cst_22 = arith.constant 0.0712685436 : f32
    %31 = vector.broadcast %cst_22 : f32 to vector<8x128xf32>
    %32 = arith.mulf %31, %27 : vector<8x128xf32>
    %33 = arith.subf %30, %32 : vector<8x128xf32>
    %cst_23 = arith.constant 0.130985275 : f32
    %34 = vector.broadcast %cst_23 : f32 to vector<8x128xf32>
    %35 = arith.mulf %34, %28 : vector<8x128xf32>
    %36 = arith.addf %33, %35 : vector<8x128xf32>
    %c0_24 = arith.constant 0 : index
    %c0_25 = arith.constant 0 : index
    %37 = vector.load %arg1[%c0_24, %c0_25] : memref<256x8xf32, #tpu.memory_space<vmem>>, vector<256x8xf32>
    %cst_26 = arith.constant dense<0.000000e+00> : vector<256x128xf32>
    %38 = tpu.matmul %37, %36, %cst_26 {dimension_numbers = #tpu.dot_dimension_numbers<[1], [0], [0], [1], [0, 0, 1, 1], [], []>} : vector<256x8xf32>, vector<8x128xf32>, vector<256x128xf32> -> vector<256x128xf32>
    %c0_27 = arith.constant 0 : index
    %c5 = arith.constant 5 : index
    %39 = vector.load %arg3[%c0_27, %c5] : memref<256x128xf32, #tpu.memory_space<vmem>>, vector<256x1xf32>
    %40 = vector.broadcast %39 : vector<256x1xf32> to vector<256x128xf32>
    %41 = arith.addf %38, %40 : vector<256x128xf32>
    %cst_28 = arith.constant 0.000000e+00 : f32
    %42 = vector.broadcast %cst_28 : f32 to vector<256x128xf32>
    %43 = arith.maximumf %41, %42 : vector<256x128xf32>
    %c0_29 = arith.constant 0 : index
    %c0_30 = arith.constant 0 : index
    %44 = vector.load %arg2[%c0_29, %c0_30] : memref<8x256xf32, #tpu.memory_space<vmem>>, vector<8x256xf32>
    %cst_31 = arith.constant dense<0.000000e+00> : vector<8x128xf32>
    %45 = tpu.matmul %44, %43, %cst_31 {dimension_numbers = #tpu.dot_dimension_numbers<[1], [0], [0], [1], [0, 0, 1, 1], [], []>} : vector<8x256xf32>, vector<256x128xf32>, vector<8x128xf32> -> vector<8x128xf32>
    %c40 = arith.constant 40 : index
    %c0_32 = arith.constant 0 : index
    %46 = vector.load %arg4[%c40, %c0_32] : memref<64x128xf32, #tpu.memory_space<vmem>>, vector<8x128xf32>
    %cst_33 = arith.constant 1.00723493 : f32
    %47 = vector.broadcast %cst_33 : f32 to vector<8x128xf32>
    %48 = arith.mulf %47, %36 : vector<8x128xf32>
    %cst_34 = arith.constant 0.0699040666 : f32
    %49 = vector.broadcast %cst_34 : f32 to vector<8x128xf32>
    %50 = arith.mulf %49, %45 : vector<8x128xf32>
    %51 = arith.subf %48, %50 : vector<8x128xf32>
    %cst_35 = arith.constant 0.119642325 : f32
    %52 = vector.broadcast %cst_35 : f32 to vector<8x128xf32>
    %53 = arith.mulf %52, %46 : vector<8x128xf32>
    %54 = arith.addf %51, %53 : vector<8x128xf32>
    %c0_36 = arith.constant 0 : index
    %c0_37 = arith.constant 0 : index
    %55 = vector.load %arg1[%c0_36, %c0_37] : memref<256x8xf32, #tpu.memory_space<vmem>>, vector<256x8xf32>
    %cst_38 = arith.constant dense<0.000000e+00> : vector<256x128xf32>
    %56 = tpu.matmul %55, %54, %cst_38 {dimension_numbers = #tpu.dot_dimension_numbers<[1], [0], [0], [1], [0, 0, 1, 1], [], []>} : vector<256x8xf32>, vector<8x128xf32>, vector<256x128xf32> -> vector<256x128xf32>
    %c0_39 = arith.constant 0 : index
    %c4 = arith.constant 4 : index
    %57 = vector.load %arg3[%c0_39, %c4] : memref<256x128xf32, #tpu.memory_space<vmem>>, vector<256x1xf32>
    %58 = vector.broadcast %57 : vector<256x1xf32> to vector<256x128xf32>
    %59 = arith.addf %56, %58 : vector<256x128xf32>
    %cst_40 = arith.constant 0.000000e+00 : f32
    %60 = vector.broadcast %cst_40 : f32 to vector<256x128xf32>
    %61 = arith.maximumf %59, %60 : vector<256x128xf32>
    %c0_41 = arith.constant 0 : index
    %c0_42 = arith.constant 0 : index
    %62 = vector.load %arg2[%c0_41, %c0_42] : memref<8x256xf32, #tpu.memory_space<vmem>>, vector<8x256xf32>
    %cst_43 = arith.constant dense<0.000000e+00> : vector<8x128xf32>
    %63 = tpu.matmul %62, %61, %cst_43 {dimension_numbers = #tpu.dot_dimension_numbers<[1], [0], [0], [1], [0, 0, 1, 1], [], []>} : vector<8x256xf32>, vector<256x128xf32>, vector<8x128xf32> -> vector<8x128xf32>
    %c32 = arith.constant 32 : index
    %c0_44 = arith.constant 0 : index
    %64 = vector.load %arg4[%c32, %c0_44] : memref<64x128xf32, #tpu.memory_space<vmem>>, vector<8x128xf32>
    %cst_45 = arith.constant 1.00578558 : f32
    %65 = vector.broadcast %cst_45 : f32 to vector<8x128xf32>
    %66 = arith.mulf %65, %54 : vector<8x128xf32>
    %cst_46 = arith.constant 0.0681821555 : f32
    %67 = vector.broadcast %cst_46 : f32 to vector<8x128xf32>
    %68 = arith.mulf %67, %63 : vector<8x128xf32>
    %69 = arith.subf %66, %68 : vector<8x128xf32>
    %cst_47 = arith.constant 0.107104756 : f32
    %70 = vector.broadcast %cst_47 : f32 to vector<8x128xf32>
    %71 = arith.mulf %70, %64 : vector<8x128xf32>
    %72 = arith.addf %69, %71 : vector<8x128xf32>
    %c0_48 = arith.constant 0 : index
    %c0_49 = arith.constant 0 : index
    %73 = vector.load %arg1[%c0_48, %c0_49] : memref<256x8xf32, #tpu.memory_space<vmem>>, vector<256x8xf32>
    %cst_50 = arith.constant dense<0.000000e+00> : vector<256x128xf32>
    %74 = tpu.matmul %73, %72, %cst_50 {dimension_numbers = #tpu.dot_dimension_numbers<[1], [0], [0], [1], [0, 0, 1, 1], [], []>} : vector<256x8xf32>, vector<8x128xf32>, vector<256x128xf32> -> vector<256x128xf32>
    %c0_51 = arith.constant 0 : index
    %c3 = arith.constant 3 : index
    %75 = vector.load %arg3[%c0_51, %c3] : memref<256x128xf32, #tpu.memory_space<vmem>>, vector<256x1xf32>
    %76 = vector.broadcast %75 : vector<256x1xf32> to vector<256x128xf32>
    %77 = arith.addf %74, %76 : vector<256x128xf32>
    %cst_52 = arith.constant 0.000000e+00 : f32
    %78 = vector.broadcast %cst_52 : f32 to vector<256x128xf32>
    %79 = arith.maximumf %77, %78 : vector<256x128xf32>
    %c0_53 = arith.constant 0 : index
    %c0_54 = arith.constant 0 : index
    %80 = vector.load %arg2[%c0_53, %c0_54] : memref<8x256xf32, #tpu.memory_space<vmem>>, vector<8x256xf32>
    %cst_55 = arith.constant dense<0.000000e+00> : vector<8x128xf32>
    %81 = tpu.matmul %80, %79, %cst_55 {dimension_numbers = #tpu.dot_dimension_numbers<[1], [0], [0], [1], [0, 0, 1, 1], [], []>} : vector<8x256xf32>, vector<256x128xf32>, vector<8x128xf32> -> vector<8x128xf32>
    %c24 = arith.constant 24 : index
    %c0_56 = arith.constant 0 : index
    %82 = vector.load %arg4[%c24, %c0_56] : memref<64x128xf32, #tpu.memory_space<vmem>>, vector<8x128xf32>
    %cst_57 = arith.constant 1.00434244 : f32
    %83 = vector.broadcast %cst_57 : f32 to vector<8x128xf32>
    %84 = arith.mulf %83, %72 : vector<8x128xf32>
    %cst_58 = arith.constant 0.0657666251 : f32
    %85 = vector.broadcast %cst_58 : f32 to vector<8x128xf32>
    %86 = arith.mulf %85, %81 : vector<8x128xf32>
    %87 = arith.subf %84, %86 : vector<8x128xf32>
    %cst_59 = arith.constant 0.0928901061 : f32
    %88 = vector.broadcast %cst_59 : f32 to vector<8x128xf32>
    %89 = arith.mulf %88, %82 : vector<8x128xf32>
    %90 = arith.addf %87, %89 : vector<8x128xf32>
    %c0_60 = arith.constant 0 : index
    %c0_61 = arith.constant 0 : index
    %91 = vector.load %arg1[%c0_60, %c0_61] : memref<256x8xf32, #tpu.memory_space<vmem>>, vector<256x8xf32>
    %cst_62 = arith.constant dense<0.000000e+00> : vector<256x128xf32>
    %92 = tpu.matmul %91, %90, %cst_62 {dimension_numbers = #tpu.dot_dimension_numbers<[1], [0], [0], [1], [0, 0, 1, 1], [], []>} : vector<256x8xf32>, vector<8x128xf32>, vector<256x128xf32> -> vector<256x128xf32>
    %c0_63 = arith.constant 0 : index
    %c2 = arith.constant 2 : index
    %93 = vector.load %arg3[%c0_63, %c2] : memref<256x128xf32, #tpu.memory_space<vmem>>, vector<256x1xf32>
    %94 = vector.broadcast %93 : vector<256x1xf32> to vector<256x128xf32>
    %95 = arith.addf %92, %94 : vector<256x128xf32>
    %cst_64 = arith.constant 0.000000e+00 : f32
    %96 = vector.broadcast %cst_64 : f32 to vector<256x128xf32>
    %97 = arith.maximumf %95, %96 : vector<256x128xf32>
    %c0_65 = arith.constant 0 : index
    %c0_66 = arith.constant 0 : index
    %98 = vector.load %arg2[%c0_65, %c0_66] : memref<8x256xf32, #tpu.memory_space<vmem>>, vector<8x256xf32>
    %cst_67 = arith.constant dense<0.000000e+00> : vector<8x128xf32>
    %99 = tpu.matmul %98, %97, %cst_67 {dimension_numbers = #tpu.dot_dimension_numbers<[1], [0], [0], [1], [0, 0, 1, 1], [], []>} : vector<8x256xf32>, vector<256x128xf32>, vector<8x128xf32> -> vector<8x128xf32>
    %c16 = arith.constant 16 : index
    %c0_68 = arith.constant 0 : index
    %100 = vector.load %arg4[%c16, %c0_68] : memref<64x128xf32, #tpu.memory_space<vmem>>, vector<8x128xf32>
    %cst_69 = arith.constant 1.00290549 : f32
    %101 = vector.broadcast %cst_69 : f32 to vector<8x128xf32>
    %102 = arith.mulf %101, %90 : vector<8x128xf32>
    %cst_70 = arith.constant 0.0618176386 : f32
    %103 = vector.broadcast %cst_70 : f32 to vector<8x128xf32>
    %104 = arith.mulf %103, %99 : vector<8x128xf32>
    %105 = arith.subf %102, %104 : vector<8x128xf32>
    %cst_71 = arith.constant 0.0760638863 : f32
    %106 = vector.broadcast %cst_71 : f32 to vector<8x128xf32>
    %107 = arith.mulf %106, %100 : vector<8x128xf32>
    %108 = arith.addf %105, %107 : vector<8x128xf32>
    %c0_72 = arith.constant 0 : index
    %c0_73 = arith.constant 0 : index
    %109 = vector.load %arg1[%c0_72, %c0_73] : memref<256x8xf32, #tpu.memory_space<vmem>>, vector<256x8xf32>
    %cst_74 = arith.constant dense<0.000000e+00> : vector<256x128xf32>
    %110 = tpu.matmul %109, %108, %cst_74 {dimension_numbers = #tpu.dot_dimension_numbers<[1], [0], [0], [1], [0, 0, 1, 1], [], []>} : vector<256x8xf32>, vector<8x128xf32>, vector<256x128xf32> -> vector<256x128xf32>
    %c0_75 = arith.constant 0 : index
    %c1 = arith.constant 1 : index
    %111 = vector.load %arg3[%c0_75, %c1] : memref<256x128xf32, #tpu.memory_space<vmem>>, vector<256x1xf32>
    %112 = vector.broadcast %111 : vector<256x1xf32> to vector<256x128xf32>
    %113 = arith.addf %110, %112 : vector<256x128xf32>
    %cst_76 = arith.constant 0.000000e+00 : f32
    %114 = vector.broadcast %cst_76 : f32 to vector<256x128xf32>
    %115 = arith.maximumf %113, %114 : vector<256x128xf32>
    %c0_77 = arith.constant 0 : index
    %c0_78 = arith.constant 0 : index
    %116 = vector.load %arg2[%c0_77, %c0_78] : memref<8x256xf32, #tpu.memory_space<vmem>>, vector<8x256xf32>
    %cst_79 = arith.constant dense<0.000000e+00> : vector<8x128xf32>
    %117 = tpu.matmul %116, %115, %cst_79 {dimension_numbers = #tpu.dot_dimension_numbers<[1], [0], [0], [1], [0, 0, 1, 1], [], []>} : vector<8x256xf32>, vector<256x128xf32>, vector<8x128xf32> -> vector<8x128xf32>
    %c8 = arith.constant 8 : index
    %c0_80 = arith.constant 0 : index
    %118 = vector.load %arg4[%c8, %c0_80] : memref<64x128xf32, #tpu.memory_space<vmem>>, vector<8x128xf32>
    %cst_81 = arith.constant 1.00147474 : f32
    %119 = vector.broadcast %cst_81 : f32 to vector<8x128xf32>
    %120 = arith.mulf %119, %108 : vector<8x128xf32>
    %cst_82 = arith.constant 0.0534305163 : f32
    %121 = vector.broadcast %cst_82 : f32 to vector<8x128xf32>
    %122 = arith.mulf %121, %117 : vector<8x128xf32>
    %123 = arith.subf %120, %122 : vector<8x128xf32>
    %cst_83 = arith.constant 0.0542481057 : f32
    %124 = vector.broadcast %cst_83 : f32 to vector<8x128xf32>
    %125 = arith.mulf %124, %118 : vector<8x128xf32>
    %126 = arith.addf %123, %125 : vector<8x128xf32>
    %c0_84 = arith.constant 0 : index
    %c0_85 = arith.constant 0 : index
    %127 = vector.load %arg1[%c0_84, %c0_85] : memref<256x8xf32, #tpu.memory_space<vmem>>, vector<256x8xf32>
    %cst_86 = arith.constant dense<0.000000e+00> : vector<256x128xf32>
    %128 = tpu.matmul %127, %126, %cst_86 {dimension_numbers = #tpu.dot_dimension_numbers<[1], [0], [0], [1], [0, 0, 1, 1], [], []>} : vector<256x8xf32>, vector<8x128xf32>, vector<256x128xf32> -> vector<256x128xf32>
    %c0_87 = arith.constant 0 : index
    %c0_88 = arith.constant 0 : index
    %129 = vector.load %arg3[%c0_87, %c0_88] : memref<256x128xf32, #tpu.memory_space<vmem>>, vector<256x1xf32>
    %130 = vector.broadcast %129 : vector<256x1xf32> to vector<256x128xf32>
    %131 = arith.addf %128, %130 : vector<256x128xf32>
    %cst_89 = arith.constant 0.000000e+00 : f32
    %132 = vector.broadcast %cst_89 : f32 to vector<256x128xf32>
    %133 = arith.maximumf %131, %132 : vector<256x128xf32>
    %c0_90 = arith.constant 0 : index
    %c0_91 = arith.constant 0 : index
    %134 = vector.load %arg2[%c0_90, %c0_91] : memref<8x256xf32, #tpu.memory_space<vmem>>, vector<8x256xf32>
    %cst_92 = arith.constant dense<0.000000e+00> : vector<8x128xf32>
    %135 = tpu.matmul %134, %133, %cst_92 {dimension_numbers = #tpu.dot_dimension_numbers<[1], [0], [0], [1], [0, 0, 1, 1], [], []>} : vector<8x256xf32>, vector<256x128xf32>, vector<8x128xf32> -> vector<8x128xf32>
    %c0_93 = arith.constant 0 : index
    %c0_94 = arith.constant 0 : index
    %136 = vector.load %arg4[%c0_93, %c0_94] : memref<64x128xf32, #tpu.memory_space<vmem>>, vector<8x128xf32>
    %cst_95 = arith.constant 1.000050e+00 : f32
    %137 = vector.broadcast %cst_95 : f32 to vector<8x128xf32>
    %138 = arith.mulf %137, %126 : vector<8x128xf32>
    %cst_96 = arith.constant 1.000050e-02 : f32
    %139 = vector.broadcast %cst_96 : f32 to vector<8x128xf32>
    %140 = arith.mulf %139, %135 : vector<8x128xf32>
    %141 = arith.subf %138, %140 : vector<8x128xf32>
    %cst_97 = arith.constant 0.00983478408 : f32
    %142 = vector.broadcast %cst_97 : f32 to vector<8x128xf32>
    %143 = arith.mulf %142, %136 : vector<8x128xf32>
    %144 = arith.addf %141, %143 : vector<8x128xf32>
    %cst_98 = arith.constant -1.000000e+00 : f32
    %cst_99 = arith.constant 1.000000e+00 : f32
    %145 = vector.broadcast %cst_98 : f32 to vector<8x128xf32>
    %146 = arith.maximumf %145, %144 : vector<8x128xf32>
    %147 = vector.broadcast %cst_99 : f32 to vector<8x128xf32>
    %148 = arith.minimumf %147, %146 : vector<8x128xf32>
    %c0_100 = arith.constant 0 : index
    %c0_101 = arith.constant 0 : index
    %149 = vector.load %arg5[%c0_100, %c0_101] : memref<8x128xf32, #tpu.memory_space<vmem>>, vector<8x128xf32>
    tpu.vector_store %arg5[%c0_100, %c0_101], %148 {strides = array<i32>} : memref<8x128xf32, #tpu.memory_space<vmem>>, vector<8x128xf32>,
    return
  }
}

</mosaic_0001>

<llo_original>
// kernel: tpu_custom_call.1
$region0: #{tpu_custom_call.1}
  #allocation0 [shape = 'u32[]', space=smem, size = 0x4, offset = 0x4, fixed_abs, tag = 'smem constant byte address 0x4 - core index']
  #allocation1 [shape = 'u32[72,128]{1,0:T(1,128)}', space=vmem, size = 0x9000, scoped, tag = 'internal scratch']
  %s0 = inlined_call_operand.hbm [shape: f32[8,128], index: 0, kind: input, shape index: {}]
  %s1 = inlined_call_operand.vmem [shape: f32[256,8], index: 1, kind: input, shape index: {}]
  %s2 = inlined_call_operand.vmem [shape: f32[8,256], index: 2, kind: input, shape index: {}]
  %s3 = inlined_call_operand.vmem [shape: f32[256,128], index: 3, kind: input, shape index: {}]
  %s4 = inlined_call_operand.hbm [shape: f32[64,128], index: 4, kind: input, shape index: {}]
  %s5 = inlined_call_operand.hbm [shape: f32[8,128], index: 5, kind: output, shape index: {}]
  %s6 = sld [smem:[#allocation0]]
  $region38: #{tpu_custom_call.1} parent=0
    _
  %s8 = ssub.s32 1, %s6
  %s9 = scalar_select 0, %s8, %s6
  $region1: #{tpu_custom_call.1} parent=0
    #allocation2 [shape = 'u8[4096]{0}', space=vmem, size = 0x1000, scoped, tag = 'input window, operand 0, single buffered']
    #allocation3 [shape = 's32[1]{0}', space=sflag, size = 0x4, scoped, tag = 'scoped memory for tpu_custom_call.1']
    #allocation4 [shape = 's32[1]{0}', space=sflag, size = 0x4, scoped, tag = 'scoped memory for tpu_custom_call.1']
    #allocation5 [shape = 'u8[32768]{0}', space=vmem, size = 0x8000, scoped, tag = 'input window, operand 4, single buffered']
    #allocation6 [shape = 's32[1]{0}', space=sflag, size = 0x4, scoped, tag = 'scoped memory for tpu_custom_call.1']
    #allocation7 [shape = 'u8[4096]{0}', space=vmem, size = 0x1000, scoped, tag = 'output window, operand 0, single buffered']
    %10 = vsyncpa [#allocation3], 0
    %11 = vsyncpa [#allocation6], 0
    %12 = vsyncpa [#allocation4], 0
    // Predicated region
    $region2: #{tpu_custom_call.1} parent=1 // pred_check
      _
    $region3: #{tpu_custom_call.1} parent=1 // pred_check_branch
      %14 = sbr.rel (0) target = $region5
    $region4: #{tpu_custom_call.1} parent=1 // pred_region
      %16 = vsyncadd [#allocation3], 0
      %s18 = sshll.u32 %s0, 4
      %s19 = int_to_ptr.hbm [resolvable:$true] %s18
      %s20 = sshll.u32 [#allocation2], 4
      %s21 = int_to_ptr.vmem [resolvable:$true] %s20
      %23 = dma.hbm_to_vmem [thread:$0]  %s19, 128, %s21, [#allocation3]
    $region5: #{tpu_custom_call.1} parent=1 // pred_fallthru
      _
    // Predicated region
    $region6: #{tpu_custom_call.1} parent=1 // pred_check
      _
    $region7: #{tpu_custom_call.1} parent=1 // pred_check_branch
      %25 = sbr.rel (0) target = $region9
    $region8: #{tpu_custom_call.1} parent=1 // pred_region
      _
    $region9: #{tpu_custom_call.1} parent=1 // pred_fallthru
      _
    // Predicated region
    $region10: #{tpu_custom_call.1} parent=1 // pred_check
      _
    $region11: #{tpu_custom_call.1} parent=1 // pred_check_branch
      %27 = sbr.rel (0) target = $region13
    $region12: #{tpu_custom_call.1} parent=1 // pred_region
      _
    $region13: #{tpu_custom_call.1} parent=1 // pred_fallthru
      _
    // Predicated region
    $region14: #{tpu_custom_call.1} parent=1 // pred_check
      _
    $region15: #{tpu_custom_call.1} parent=1 // pred_check_branch
      %29 = sbr.rel (0) target = $region17
    $region16: #{tpu_custom_call.1} parent=1 // pred_region
      _
    $region17: #{tpu_custom_call.1} parent=1 // pred_fallthru
      _
    // Predicated region
    $region18: #{tpu_custom_call.1} parent=1 // pred_check
      _
    $region19: #{tpu_custom_call.1} parent=1 // pred_check_branch
      %31 = sbr.rel (0) target = $region21
    $region20: #{tpu_custom_call.1} parent=1 // pred_region
      %33 = vsyncadd [#allocation6], 0
      %s34 = sshll.u32 %s4, 4
      %s35 = int_to_ptr.hbm [resolvable:$true] %s34
      %s36 = sshll.u32 [#allocation5], 4
      %s37 = int_to_ptr.vmem [resolvable:$true] %s36
      %42 = dma.hbm_to_vmem [thread:$0]  %s35, 1024, %s37, [#allocation6], 128, 128, 8
    $region21: #{tpu_custom_call.1} parent=1 // pred_fallthru
      _
    // Predicated region
    $region22: #{tpu_custom_call.1} parent=1 // pred_check
      _
    $region23: #{tpu_custom_call.1} parent=1 // pred_check_branch
      %44 = sbr.rel (0) target = $region25
    $region24: #{tpu_custom_call.1} parent=1 // pred_region
      %46 = dma.done [#allocation3], 128
    $region25: #{tpu_custom_call.1} parent=1 // pred_fallthru
      _
    // Predicated region
    $region26: #{tpu_custom_call.1} parent=1 // pred_check
      _
    $region27: #{tpu_custom_call.1} parent=1 // pred_check_branch
      %48 = sbr.rel (0) target = $region29
    $region28: #{tpu_custom_call.1} parent=1 // pred_region
      %50 = dma.done [#allocation6], 1024
    $region29: #{tpu_custom_call.1} parent=1 // pred_fallthru
      _
    %v51 = vld [vmem:[#allocation2] sm:$0xff]
    %v52 = vld [vmem:[%s1] sm:$0xff]
    %v53 = vld [vmem:[%s1 + $0x8] sm:$0xff]
    %v54 = vld [vmem:[%s1 + $0x10] sm:$0xff]
    %v55 = vld [vmem:[%s1 + $0x18] sm:$0xff]
    %v56 = vld [vmem:[%s1 + $0x20] sm:$0xff]
    %v57 = vld [vmem:[%s1 + $0x28] sm:$0xff]
    %v58 = vld [vmem:[%s1 + $0x30] sm:$0xff]
    %v59 = vld [vmem:[%s1 + $0x38] sm:$0xff]
    %v60 = vld [vmem:[%s1 + $0x40] sm:$0xff]
    %v61 = vld [vmem:[%s1 + $0x48] sm:$0xff]
    %v62 = vld [vmem:[%s1 + $0x50] sm:$0xff]
    %v63 = vld [vmem:[%s1 + $0x58] sm:$0xff]
    %v64 = vld [vmem:[%s1 + $0x60] sm:$0xff]
    %v65 = vld [vmem:[%s1 + $0x68] sm:$0xff]
    %v66 = vld [vmem:[%s1 + $0x70] sm:$0xff]
    %v67 = vld [vmem:[%s1 + $0x78] sm:$0xff]
    %v68 = vld [vmem:[%s1 + $0x80] sm:$0xff]
    %v69 = vld [vmem:[%s1 + $0x88] sm:$0xff]
    %v70 = vld [vmem:[%s1 + $0x90] sm:$0xff]
    %v71 = vld [vmem:[%s1 + $0x98] sm:$0xff]
    %v72 = vld [vmem:[%s1 + $0xa0] sm:$0xff]
    %v73 = vld [vmem:[%s1 + $0xa8] sm:$0xff]
    %v74 = vld [vmem:[%s1 + $0xb0] sm:$0xff]
    %v75 = vld [vmem:[%s1 + $0xb8] sm:$0xff]
    %v76 = vld [vmem:[%s1 + $0xc0] sm:$0xff]
    %v77 = vld [vmem:[%s1 + $0xc8] sm:$0xff]
    %v78 = vld [vmem:[%s1 + $0xd0] sm:$0xff]
    %v79 = vld [vmem:[%s1 + $0xd8] sm:$0xff]
    %v80 = vld [vmem:[%s1 + $0xe0] sm:$0xff]
    %v81 = vld [vmem:[%s1 + $0xe8] sm:$0xff]
    %v82 = vld [vmem:[%s1 + $0xf0] sm:$0xff]
    %v83 = vld [vmem:[%s1 + $0xf8] sm:$0xff]
    %v84 = vld [vmem:[%s3] sm:$0xff]
    %v85 = vld [vmem:[%s3 + $0x8] sm:$0xff]
    %v86 = vld [vmem:[%s3 + $0x10] sm:$0xff]
    %v87 = vld [vmem:[%s3 + $0x18] sm:$0xff]
    %v88 = vld [vmem:[%s3 + $0x20] sm:$0xff]
    %v89 = vld [vmem:[%s3 + $0x28] sm:$0xff]
    %v90 = vld [vmem:[%s3 + $0x30] sm:$0xff]
    %v91 = vld [vmem:[%s3 + $0x38] sm:$0xff]
    %v92 = vld [vmem:[%s3 + $0x40] sm:$0xff]
    %v93 = vld [vmem:[%s3 + $0x48] sm:$0xff]
    %v94 = vld [vmem:[%s3 + $0x50] sm:$0xff]
    %v95 = vld [vmem:[%s3 + $0x58] sm:$0xff]
    %v96 = vld [vmem:[%s3 + $0x60] sm:$0xff]
    %v97 = vld [vmem:[%s3 + $0x68] sm:$0xff]
    %v98 = vld [vmem:[%s3 + $0x70] sm:$0xff]
    %v99 = vld [vmem:[%s3 + $0x78] sm:$0xff]
    %v100 = vld [vmem:[%s3 + $0x80] sm:$0xff]
    %v101 = vld [vmem:[%s3 + $0x88] sm:$0xff]
    %v102 = vld [vmem:[%s3 + $0x90] sm:$0xff]
    %v103 = vld [vmem:[%s3 + $0x98] sm:$0xff]
    %v104 = vld [vmem:[%s3 + $0xa0] sm:$0xff]
    %v105 = vld [vmem:[%s3 + $0xa8] sm:$0xff]
    %v106 = vld [vmem:[%s3 + $0xb0] sm:$0xff]
    %v107 = vld [vmem:[%s3 + $0xb8] sm:$0xff]
    %v108 = vld [vmem:[%s3 + $0xc0] sm:$0xff]
    %v109 = vld [vmem:[%s3 + $0xc8] sm:$0xff]
    %v110 = vld [vmem:[%s3 + $0xd0] sm:$0xff]
    %v111 = vld [vmem:[%s3 + $0xd8] sm:$0xff]
    %v112 = vld [vmem:[%s3 + $0xe0] sm:$0xff]
    %v113 = vld [vmem:[%s3 + $0xe8] sm:$0xff]
    %v114 = vld [vmem:[%s3 + $0xf0] sm:$0xff]
    %v115 = vld [vmem:[%s3 + $0xf8] sm:$0xff]
    %117 = vset.pattern.permute.xlu0 7
    %118 = vperm.xlu0 %117, %v84
    %v119 = vpop.permute.xlu0 %118
    %122 = vset.pattern.permute.xlu0 7
    %123 = vperm.xlu0 %122, %v85
    %v124 = vpop.permute.xlu0 %123
    %127 = vset.pattern.permute.xlu0 7
    %128 = vperm.xlu0 %127, %v86
    %v129 = vpop.permute.xlu0 %128
    %132 = vset.pattern.permute.xlu0 7
    %133 = vperm.xlu0 %132, %v87
    %v134 = vpop.permute.xlu0 %133
    %137 = vset.pattern.permute.xlu0 7
    %138 = vperm.xlu0 %137, %v88
    %v139 = vpop.permute.xlu0 %138
    %142 = vset.pattern.permute.xlu0 7
    %143 = vperm.xlu0 %142, %v89
    %v144 = vpop.permute.xlu0 %143
    %147 = vset.pattern.permute.xlu0 7
    %148 = vperm.xlu0 %147, %v90
    %v149 = vpop.permute.xlu0 %148
    %152 = vset.pattern.permute.xlu0 7
    %153 = vperm.xlu0 %152, %v91
    %v154 = vpop.permute.xlu0 %153
    %157 = vset.pattern.permute.xlu0 7
    %158 = vperm.xlu0 %157, %v92
    %v159 = vpop.permute.xlu0 %158
    %162 = vset.pattern.permute.xlu0 7
    %163 = vperm.xlu0 %162, %v93
    %v164 = vpop.permute.xlu0 %163
    %167 = vset.pattern.permute.xlu0 7
    %168 = vperm.xlu0 %167, %v94
    %v169 = vpop.permute.xlu0 %168
    %172 = vset.pattern.permute.xlu0 7
    %173 = vperm.xlu0 %172, %v95
    %v174 = vpop.permute.xlu0 %173
    %177 = vset.pattern.permute.xlu0 7
    %178 = vperm.xlu0 %177, %v96
    %v179 = vpop.permute.xlu0 %178
    %182 = vset.pattern.permute.xlu0 7
    %183 = vperm.xlu0 %182, %v97
    %v184 = vpop.permute.xlu0 %183
    %187 = vset.pattern.permute.xlu0 7
    %188 = vperm.xlu0 %187, %v98
    %v189 = vpop.permute.xlu0 %188
    %192 = vset.pattern.permute.xlu0 7
    %193 = vperm.xlu0 %192, %v99
    %v194 = vpop.permute.xlu0 %193
    %197 = vset.pattern.permute.xlu0 7
    %198 = vperm.xlu0 %197, %v100
    %v199 = vpop.permute.xlu0 %198
    %202 = vset.pattern.permute.xlu0 7
    %203 = vperm.xlu0 %202, %v101
    %v204 = vpop.permute.xlu0 %203
    %207 = vset.pattern.permute.xlu0 7
    %208 = vperm.xlu0 %207, %v102
    %v209 = vpop.permute.xlu0 %208
    %212 = vset.pattern.permute.xlu0 7
    %213 = vperm.xlu0 %212, %v103
    %v214 = vpop.permute.xlu0 %213
    %217 = vset.pattern.permute.xlu0 7
    %218 = vperm.xlu0 %217, %v104
    %v219 = vpop.permute.xlu0 %218
    %222 = vset.pattern.permute.xlu0 7
    %223 = vperm.xlu0 %222, %v105
    %v224 = vpop.permute.xlu0 %223
    %227 = vset.pattern.permute.xlu0 7
    %228 = vperm.xlu0 %227, %v106
    %v229 = vpop.permute.xlu0 %228
    %232 = vset.pattern.permute.xlu0 7
    %233 = vperm.xlu0 %232, %v107
    %v234 = vpop.permute.xlu0 %233
    %237 = vset.pattern.permute.xlu0 7
    %238 = vperm.xlu0 %237, %v108
    %v239 = vpop.permute.xlu0 %238
    %242 = vset.pattern.permute.xlu0 7
    %243 = vperm.xlu0 %242, %v109
    %v244 = vpop.permute.xlu0 %243
    %247 = vset.pattern.permute.xlu0 7
    %248 = vperm.xlu0 %247, %v110
    %v249 = vpop.permute.xlu0 %248
    %252 = vset.pattern.permute.xlu0 7
    %253 = vperm.xlu0 %252, %v111
    %v254 = vpop.permute.xlu0 %253
    %257 = vset.pattern.permute.xlu0 7
    %258 = vperm.xlu0 %257, %v112
    %v259 = vpop.permute.xlu0 %258
    %262 = vset.pattern.permute.xlu0 7
    %263 = vperm.xlu0 %262, %v113
    %v264 = vpop.permute.xlu0 %263
    %267 = vset.pattern.permute.xlu0 7
    %268 = vperm.xlu0 %267, %v114
    %v269 = vpop.permute.xlu0 %268
    %272 = vset.pattern.permute.xlu0 7
    %273 = vperm.xlu0 %272, %v115
    %v274 = vpop.permute.xlu0 %273
    %vm276 = vcmask 64512
    %v278 = vsel %vm276, %v52, 0
    %v281 = vsel %vm276, %v53, 0
    %v284 = vsel %vm276, %v54, 0
    %v287 = vsel %vm276, %v55, 0
    %v290 = vsel %vm276, %v56, 0
    %v293 = vsel %vm276, %v57, 0
    %v296 = vsel %vm276, %v58, 0
    %v299 = vsel %vm276, %v59, 0
    %v302 = vsel %vm276, %v60, 0
    %v305 = vsel %vm276, %v61, 0
    %v308 = vsel %vm276, %v62, 0
    %v311 = vsel %vm276, %v63, 0
    %v314 = vsel %vm276, %v64, 0
    %v317 = vsel %vm276, %v65, 0
    %v320 = vsel %vm276, %v66, 0
    %v323 = vsel %vm276, %v67, 0
    %v326 = vsel %vm276, %v68, 0
    %v329 = vsel %vm276, %v69, 0
    %v332 = vsel %vm276, %v70, 0
    %v335 = vsel %vm276, %v71, 0
    %v338 = vsel %vm276, %v72, 0
    %v341 = vsel %vm276, %v73, 0
    %v344 = vsel %vm276, %v74, 0
    %v347 = vsel %vm276, %v75, 0
    %v350 = vsel %vm276, %v76, 0
    %v353 = vsel %vm276, %v77, 0
    %v356 = vsel %vm276, %v78, 0
    %v359 = vsel %vm276, %v79, 0
    %v362 = vsel %vm276, %v80, 0
    %v365 = vsel %vm276, %v81, 0
    %v368 = vsel %vm276, %v82, 0
    %v371 = vsel %vm276, %v83, 0
    %373 = vmatpush.msra.mxu0 0.0
    %374 = vmatpush.msra.mxu0 0.0
    %375 = vmatpush.msra.mxu0 0.0
    %376 = vmatpush.msra.mxu0 0.0
    %377 = vmatpush.msra.mxu0 0.0
    %378 = vmatpush.msra.mxu0 0.0
    %379 = vmatpush.msra.mxu0 0.0
    %380 = vmatpush.msra.mxu0 0.0
    %381 = vmatpush.msra.mxu0 0.0
    %382 = vmatpush.msra.mxu0 0.0
    %383 = vmatpush.msra.mxu0 0.0
    %384 = vmatpush.msra.mxu0 0.0
    %385 = vmatpush.msra.mxu0 0.0
    %386 = vmatpush.msra.mxu0 0.0
    %387 = vmatpush.msra.mxu0 0.0
    %388 = vmatpush.msra.mxu0 %v51
    %389 = vmatmul.f32.gmra.mxu0 %v278
    %v390 = vpop.f32.mrf.mxu0
    %v391 = vadd.f32 %v119, %v390
    %392 = vmatmul.f32.gmra.mxu0 %v281
    %v393 = vpop.f32.mrf.mxu0
    %v394 = vadd.f32 %v124, %v393
    %395 = vmatmul.f32.gmra.mxu0 %v284
    %v396 = vpop.f32.mrf.mxu0
    %v397 = vadd.f32 %v129, %v396
    %398 = vmatmul.f32.gmra.mxu0 %v287
    %v399 = vpop.f32.mrf.mxu0
    %v400 = vadd.f32 %v134, %v399
    %401 = vmatmul.f32.gmra.mxu0 %v290
    %v402 = vpop.f32.mrf.mxu0
    %v403 = vadd.f32 %v139, %v402
    %404 = vmatmul.f32.gmra.mxu0 %v293
    %v405 = vpop.f32.mrf.mxu0
    %v406 = vadd.f32 %v144, %v405
    %407 = vmatmul.f32.gmra.mxu0 %v296
    %v408 = vpop.f32.mrf.mxu0
    %v409 = vadd.f32 %v149, %v408
    %410 = vmatmul.f32.gmra.mxu0 %v299
    %v411 = vpop.f32.mrf.mxu0
    %v412 = vadd.f32 %v154, %v411
    %413 = vmatmul.f32.gmra.mxu0 %v302
    %v414 = vpop.f32.mrf.mxu0
    %v415 = vadd.f32 %v159, %v414
    %416 = vmatmul.f32.gmra.mxu0 %v305
    %v417 = vpop.f32.mrf.mxu0
    %v418 = vadd.f32 %v164, %v417
    %419 = vmatmul.f32.gmra.mxu0 %v308
    %v420 = vpop.f32.mrf.mxu0
    %v421 = vadd.f32 %v169, %v420
    %422 = vmatmul.f32.gmra.mxu0 %v311
    %v423 = vpop.f32.mrf.mxu0
    %v424 = vadd.f32 %v174, %v423
    %425 = vmatmul.f32.gmra.mxu0 %v314
    %v426 = vpop.f32.mrf.mxu0
    %v427 = vadd.f32 %v179, %v426
    %428 = vmatmul.f32.gmra.mxu0 %v317
    %v429 = vpop.f32.mrf.mxu0
    %v430 = vadd.f32 %v184, %v429
    %431 = vmatmul.f32.gmra.mxu0 %v320
    %v432 = vpop.f32.mrf.mxu0
    %v433 = vadd.f32 %v189, %v432
    %434 = vmatmul.f32.gmra.mxu0 %v323
    %v435 = vpop.f32.mrf.mxu0
    %v436 = vadd.f32 %v194, %v435
    %437 = vmatmul.f32.gmra.mxu0 %v326
    %v438 = vpop.f32.mrf.mxu0
    %v439 = vadd.f32 %v199, %v438
    %440 = vmatmul.f32.gmra.mxu0 %v329
    %v441 = vpop.f32.mrf.mxu0
    %v442 = vadd.f32 %v204, %v441
    %443 = vmatmul.f32.gmra.mxu0 %v332
    %v444 = vpop.f32.mrf.mxu0
    %v445 = vadd.f32 %v209, %v444
    %446 = vmatmul.f32.gmra.mxu0 %v335
    %v447 = vpop.f32.mrf.mxu0
    %v448 = vadd.f32 %v214, %v447
    %449 = vmatmul.f32.gmra.mxu0 %v338
    %v450 = vpop.f32.mrf.mxu0
    %v451 = vadd.f32 %v219, %v450
    %452 = vmatmul.f32.gmra.mxu0 %v341
    %v453 = vpop.f32.mrf.mxu0
    %v454 = vadd.f32 %v224, %v453
    %455 = vmatmul.f32.gmra.mxu0 %v344
    %v456 = vpop.f32.mrf.mxu0
    %v457 = vadd.f32 %v229, %v456
    %458 = vmatmul.f32.gmra.mxu0 %v347
    %v459 = vpop.f32.mrf.mxu0
    %v460 = vadd.f32 %v234, %v459
    %461 = vmatmul.f32.gmra.mxu0 %v350
    %v462 = vpop.f32.mrf.mxu0
    %v463 = vadd.f32 %v239, %v462
    %464 = vmatmul.f32.gmra.mxu0 %v353
    %v465 = vpop.f32.mrf.mxu0
    %v466 = vadd.f32 %v244, %v465
    %467 = vmatmul.f32.gmra.mxu0 %v356
    %v468 = vpop.f32.mrf.mxu0
    %v469 = vadd.f32 %v249, %v468
    %470 = vmatmul.f32.gmra.mxu0 %v359
    %v471 = vpop.f32.mrf.mxu0
    %v472 = vadd.f32 %v254, %v471
    %473 = vmatmul.f32.gmra.mxu0 %v362
    %v474 = vpop.f32.mrf.mxu0
    %v475 = vadd.f32 %v259, %v474
    %476 = vmatmul.f32.gmra.mxu0 %v365
    %v477 = vpop.f32.mrf.mxu0
    %v478 = vadd.f32 %v264, %v477
    %479 = vmatmul.f32.gmra.mxu0 %v368
    %v480 = vpop.f32.mrf.mxu0
    %v481 = vadd.f32 %v269, %v480
    %482 = vmatmul.f32.gmra.mxu0 %v371
    %v483 = vpop.f32.mrf.mxu0
    %v484 = vadd.f32 %v274, %v483
    %485 = vdwg.mxu0
    %v486 = vmax.f32 %v391, 0.0
    %v487 = vmax.f32 %v394, 0.0
    %v488 = vmax.f32 %v397, 0.0
    %v489 = vmax.f32 %v400, 0.0
    %v490 = vmax.f32 %v403, 0.0
    %v491 = vmax.f32 %v406, 0.0
    %v492 = vmax.f32 %v409, 0.0
    %v493 = vmax.f32 %v412, 0.0
    %v494 = vmax.f32 %v415, 0.0
    %v495 = vmax.f32 %v418, 0.0
    %v496 = vmax.f32 %v421, 0.0
    %v497 = vmax.f32 %v424, 0.0
    %v498 = vmax.f32 %v427, 0.0
    %v499 = vmax.f32 %v430, 0.0
    %v500 = vmax.f32 %v433, 0.0
    %v501 = vmax.f32 %v436, 0.0
    %v502 = vmax.f32 %v439, 0.0
    %v503 = vmax.f32 %v442, 0.0
    %v504 = vmax.f32 %v445, 0.0
    %v505 = vmax.f32 %v448, 0.0
    %v506 = vmax.f32 %v451, 0.0
    %v507 = vmax.f32 %v454, 0.0
    %v508 = vmax.f32 %v457, 0.0
    %v509 = vmax.f32 %v460, 0.0
    %v510 = vmax.f32 %v463, 0.0
    %v511 = vmax.f32 %v466, 0.0
    %v512 = vmax.f32 %v469, 0.0
    %v513 = vmax.f32 %v472, 0.0
    %v514 = vmax.f32 %v475, 0.0
    %v515 = vmax.f32 %v478, 0.0
    %v516 = vmax.f32 %v481, 0.0
    %v517 = vmax.f32 %v484, 0.0
    %v518 = vld [vmem:[%s2] sm:$0xff]
    %v519 = vld [vmem:[%s2 + $0x8] sm:$0xff]
    %520 = vmatpush.msra.mxu0 %v501
    %521 = vmatpush.msra.mxu0 %v500
    %522 = vmatpush.msra.mxu0 %v499
    %523 = vmatpush.msra.mxu0 %v498
    %524 = vmatpush.msra.mxu0 %v497
    %525 = vmatpush.msra.mxu0 %v496
    %526 = vmatpush.msra.mxu0 %v495
    %527 = vmatpush.msra.mxu0 %v494
    %528 = vmatpush.msra.mxu0 %v493
    %529 = vmatpush.msra.mxu0 %v492
    %530 = vmatpush.msra.mxu0 %v491
    %531 = vmatpush.msra.mxu0 %v490
    %532 = vmatpush.msra.mxu0 %v489
    %533 = vmatpush.msra.mxu0 %v488
    %534 = vmatpush.msra.mxu0 %v487
    %535 = vmatpush.msra.mxu0 %v486
    %536 = vmatmul.f32.gmra.mxu0 %v518
    %v537 = vpop.f32.mrf.mxu0
    %v538 = vadd.f32 0.0, %v537
    %539 = vdwg.mxu0
    %540 = vmatpush.msra.mxu0 %v517
    %541 = vmatpush.msra.mxu0 %v516
    %542 = vmatpush.msra.mxu0 %v515
    %543 = vmatpush.msra.mxu0 %v514
    %544 = vmatpush.msra.mxu0 %v513
    %545 = vmatpush.msra.mxu0 %v512
    %546 = vmatpush.msra.mxu0 %v511
    %547 = vmatpush.msra.mxu0 %v510
    %548 = vmatpush.msra.mxu0 %v509
    %549 = vmatpush.msra.mxu0 %v508
    %550 = vmatpush.msra.mxu0 %v507
    %551 = vmatpush.msra.mxu0 %v506
    %552 = vmatpush.msra.mxu0 %v505
    %553 = vmatpush.msra.mxu0 %v504
    %554 = vmatpush.msra.mxu0 %v503
    %555 = vmatpush.msra.mxu0 %v502
    %556 = vmatmul.f32.gmra.mxu0 %v519
    %v557 = vpop.f32.mrf.mxu0
    %v558 = vadd.f32 %v538, %v557
    %559 = vdwg.mxu0
    %v560 = vld [vmem:[#allocation5 + $0x38] sm:$0xff]
    %v561 = vmul.f32 %v51, 1.0101526
    %v562 = vmul.f32 %v558, 0.07243713
    %v563 = vsub.f32 %v561, %v562
    %v564 = vmul.f32 %v560, 0.14142136
    %v565 = vadd.f32 %v563, %v564
    %566 = vset.pattern.permute.xlu0 6
    %567 = vperm.xlu0 %566, %v84
    %v568 = vpop.permute.xlu0 %567
    %570 = vset.pattern.permute.xlu0 6
    %571 = vperm.xlu0 %570, %v85
    %v572 = vpop.permute.xlu0 %571
    %574 = vset.pattern.permute.xlu0 6
    %575 = vperm.xlu0 %574, %v86
    %v576 = vpop.permute.xlu0 %575
    %578 = vset.pattern.permute.xlu0 6
    %579 = vperm.xlu0 %578, %v87
    %v580 = vpop.permute.xlu0 %579
    %582 = vset.pattern.permute.xlu0 6
    %583 = vperm.xlu0 %582, %v88
    %v584 = vpop.permute.xlu0 %583
    %586 = vset.pattern.permute.xlu0 6
    %587 = vperm.xlu0 %586, %v89
    %v588 = vpop.permute.xlu0 %587
    %590 = vset.pattern.permute.xlu0 6
    %591 = vperm.xlu0 %590, %v90
    %v592 = vpop.permute.xlu0 %591
    %594 = vset.pattern.permute.xlu0 6
    %595 = vperm.xlu0 %594, %v91
    %v596 = vpop.permute.xlu0 %595
    %598 = vset.pattern.permute.xlu0 6
    %599 = vperm.xlu0 %598, %v92
    %v600 = vpop.permute.xlu0 %599
    %602 = vset.pattern.permute.xlu0 6
    %603 = vperm.xlu0 %602, %v93
    %v604 = vpop.permute.xlu0 %603
    %606 = vset.pattern.permute.xlu0 6
    %607 = vperm.xlu0 %606, %v94
    %v608 = vpop.permute.xlu0 %607
    %610 = vset.pattern.permute.xlu0 6
    %611 = vperm.xlu0 %610, %v95
    %v612 = vpop.permute.xlu0 %611
    %614 = vset.pattern.permute.xlu0 6
    %615 = vperm.xlu0 %614, %v96
    %v616 = vpop.permute.xlu0 %615
    %618 = vset.pattern.permute.xlu0 6
    %619 = vperm.xlu0 %618, %v97
    %v620 = vpop.permute.xlu0 %619
    %622 = vset.pattern.permute.xlu0 6
    %623 = vperm.xlu0 %622, %v98
    %v624 = vpop.permute.xlu0 %623
    %626 = vset.pattern.permute.xlu0 6
    %627 = vperm.xlu0 %626, %v99
    %v628 = vpop.permute.xlu0 %627
    %630 = vset.pattern.permute.xlu0 6
    %631 = vperm.xlu0 %630, %v100
    %v632 = vpop.permute.xlu0 %631
    %634 = vset.pattern.permute.xlu0 6
    %635 = vperm.xlu0 %634, %v101
    %v636 = vpop.permute.xlu0 %635
    %638 = vset.pattern.permute.xlu0 6
    %639 = vperm.xlu0 %638, %v102
    %v640 = vpop.permute.xlu0 %639
    %642 = vset.pattern.permute.xlu0 6
    %643 = vperm.xlu0 %642, %v103
    %v644 = vpop.permute.xlu0 %643
    %646 = vset.pattern.permute.xlu0 6
    %647 = vperm.xlu0 %646, %v104
    %v648 = vpop.permute.xlu0 %647
    %650 = vset.pattern.permute.xlu0 6
    %651 = vperm.xlu0 %650, %v105
    %v652 = vpop.permute.xlu0 %651
    %654 = vset.pattern.permute.xlu0 6
    %655 = vperm.xlu0 %654, %v106
    %v656 = vpop.permute.xlu0 %655
    %658 = vset.pattern.permute.xlu0 6
    %659 = vperm.xlu0 %658, %v107
    %v660 = vpop.permute.xlu0 %659
    %662 = vset.pattern.permute.xlu0 6
    %663 = vperm.xlu0 %662, %v108
    %v664 = vpop.permute.xlu0 %663
    %666 = vset.pattern.permute.xlu0 6
    %667 = vperm.xlu0 %666, %v109
    %v668 = vpop.permute.xlu0 %667
    %670 = vset.pattern.permute.xlu0 6
    %671 = vperm.xlu0 %670, %v110
    %v672 = vpop.permute.xlu0 %671
    %674 = vset.pattern.permute.xlu0 6
    %675 = vperm.xlu0 %674, %v111
    %v676 = vpop.permute.xlu0 %675
    %678 = vset.pattern.permute.xlu0 6
    %679 = vperm.xlu0 %678, %v112
    %v680 = vpop.permute.xlu0 %679
    %682 = vset.pattern.permute.xlu0 6
    %683 = vperm.xlu0 %682, %v113
    %v684 = vpop.permute.xlu0 %683
    %686 = vset.pattern.permute.xlu0 6
    %687 = vperm.xlu0 %686, %v114
    %v688 = vpop.permute.xlu0 %687
    %690 = vset.pattern.permute.xlu0 6
    %691 = vperm.xlu0 %690, %v115
    %v692 = vpop.permute.xlu0 %691
    %694 = vmatpush.msra.mxu0 0.0
    %695 = vmatpush.msra.mxu0 0.0
    %696 = vmatpush.msra.mxu0 0.0
    %697 = vmatpush.msra.mxu0 0.0
    %698 = vmatpush.msra.mxu0 0.0
    %699 = vmatpush.msra.mxu0 0.0
    %700 = vmatpush.msra.mxu0 0.0
    %701 = vmatpush.msra.mxu0 0.0
    %702 = vmatpush.msra.mxu0 0.0
    %703 = vmatpush.msra.mxu0 0.0
    %704 = vmatpush.msra.mxu0 0.0
    %705 = vmatpush.msra.mxu0 0.0
    %706 = vmatpush.msra.mxu0 0.0
    %707 = vmatpush.msra.mxu0 0.0
    %708 = vmatpush.msra.mxu0 0.0
    %709 = vmatpush.msra.mxu0 %v565
    %710 = vmatmul.f32.gmra.mxu0 %v278
    %v711 = vpop.f32.mrf.mxu0
    %v712 = vadd.f32 %v568, %v711
    %713 = vmatmul.f32.gmra.mxu0 %v281
    %v714 = vpop.f32.mrf.mxu0
    %v715 = vadd.f32 %v572, %v714
    %716 = vmatmul.f32.gmra.mxu0 %v284
    %v717 = vpop.f32.mrf.mxu0
    %v718 = vadd.f32 %v576, %v717
    %719 = vmatmul.f32.gmra.mxu0 %v287
    %v720 = vpop.f32.mrf.mxu0
    %v721 = vadd.f32 %v580, %v720
    %722 = vmatmul.f32.gmra.mxu0 %v290
    %v723 = vpop.f32.mrf.mxu0
    %v724 = vadd.f32 %v584, %v723
    %725 = vmatmul.f32.gmra.mxu0 %v293
    %v726 = vpop.f32.mrf.mxu0
    %v727 = vadd.f32 %v588, %v726
    %728 = vmatmul.f32.gmra.mxu0 %v296
    %v729 = vpop.f32.mrf.mxu0
    %v730 = vadd.f32 %v592, %v729
    %731 = vmatmul.f32.gmra.mxu0 %v299
    %v732 = vpop.f32.mrf.mxu0
    %v733 = vadd.f32 %v596, %v732
    %734 = vmatmul.f32.gmra.mxu0 %v302
    %v735 = vpop.f32.mrf.mxu0
    %v736 = vadd.f32 %v600, %v735
    %737 = vmatmul.f32.gmra.mxu0 %v305
    %v738 = vpop.f32.mrf.mxu0
    %v739 = vadd.f32 %v604, %v738
    %740 = vmatmul.f32.gmra.mxu0 %v308
    %v741 = vpop.f32.mrf.mxu0
    %v742 = vadd.f32 %v608, %v741
    %743 = vmatmul.f32.gmra.mxu0 %v311
    %v744 = vpop.f32.mrf.mxu0
    %v745 = vadd.f32 %v612, %v744
    %746 = vmatmul.f32.gmra.mxu0 %v314
    %v747 = vpop.f32.mrf.mxu0
    %v748 = vadd.f32 %v616, %v747
    %749 = vmatmul.f32.gmra.mxu0 %v317
    %v750 = vpop.f32.mrf.mxu0
    %v751 = vadd.f32 %v620, %v750
    %752 = vmatmul.f32.gmra.mxu0 %v320
    %v753 = vpop.f32.mrf.mxu0
    %v754 = vadd.f32 %v624, %v753
    %755 = vmatmul.f32.gmra.mxu0 %v323
    %v756 = vpop.f32.mrf.mxu0
    %v757 = vadd.f32 %v628, %v756
    %758 = vmatmul.f32.gmra.mxu0 %v326
    %v759 = vpop.f32.mrf.mxu0
    %v760 = vadd.f32 %v632, %v759
    %761 = vmatmul.f32.gmra.mxu0 %v329
    %v762 = vpop.f32.mrf.mxu0
    %v763 = vadd.f32 %v636, %v762
    %764 = vmatmul.f32.gmra.mxu0 %v332
    %v765 = vpop.f32.mrf.mxu0
    %v766 = vadd.f32 %v640, %v765
    %767 = vmatmul.f32.gmra.mxu0 %v335
    %v768 = vpop.f32.mrf.mxu0
    %v769 = vadd.f32 %v644, %v768
    %770 = vmatmul.f32.gmra.mxu0 %v338
    %v771 = vpop.f32.mrf.mxu0
    %v772 = vadd.f32 %v648, %v771
    %773 = vmatmul.f32.gmra.mxu0 %v341
    %v774 = vpop.f32.mrf.mxu0
    %v775 = vadd.f32 %v652, %v774
    %776 = vmatmul.f32.gmra.mxu0 %v344
    %v777 = vpop.f32.mrf.mxu0
    %v778 = vadd.f32 %v656, %v777
    %779 = vmatmul.f32.gmra.mxu0 %v347
    %v780 = vpop.f32.mrf.mxu0
    %v781 = vadd.f32 %v660, %v780
    %782 = vmatmul.f32.gmra.mxu0 %v350
    %v783 = vpop.f32.mrf.mxu0
    %v784 = vadd.f32 %v664, %v783
    %785 = vmatmul.f32.gmra.mxu0 %v353
    %v786 = vpop.f32.mrf.mxu0
    %v787 = vadd.f32 %v668, %v786
    %788 = vmatmul.f32.gmra.mxu0 %v356
    %v789 = vpop.f32.mrf.mxu0
    %v790 = vadd.f32 %v672, %v789
    %791 = vmatmul.f32.gmra.mxu0 %v359
    %v792 = vpop.f32.mrf.mxu0
    %v793 = vadd.f32 %v676, %v792
    %794 = vmatmul.f32.gmra.mxu0 %v362
    %v795 = vpop.f32.mrf.mxu0
    %v796 = vadd.f32 %v680, %v795
    %797 = vmatmul.f32.gmra.mxu0 %v365
    %v798 = vpop.f32.mrf.mxu0
    %v799 = vadd.f32 %v684, %v798
    %800 = vmatmul.f32.gmra.mxu0 %v368
    %v801 = vpop.f32.mrf.mxu0
    %v802 = vadd.f32 %v688, %v801
    %803 = vmatmul.f32.gmra.mxu0 %v371
    %v804 = vpop.f32.mrf.mxu0
    %v805 = vadd.f32 %v692, %v804
    %806 = vdwg.mxu0
    %v807 = vmax.f32 %v712, 0.0
    %v808 = vmax.f32 %v715, 0.0
    %v809 = vmax.f32 %v718, 0.0
    %v810 = vmax.f32 %v721, 0.0
    %v811 = vmax.f32 %v724, 0.0
    %v812 = vmax.f32 %v727, 0.0
    %v813 = vmax.f32 %v730, 0.0
    %v814 = vmax.f32 %v733, 0.0
    %v815 = vmax.f32 %v736, 0.0
    %v816 = vmax.f32 %v739, 0.0
    %v817 = vmax.f32 %v742, 0.0
    %v818 = vmax.f32 %v745, 0.0
    %v819 = vmax.f32 %v748, 0.0
    %v820 = vmax.f32 %v751, 0.0
    %v821 = vmax.f32 %v754, 0.0
    %v822 = vmax.f32 %v757, 0.0
    %v823 = vmax.f32 %v760, 0.0
    %v824 = vmax.f32 %v763, 0.0
    %v825 = vmax.f32 %v766, 0.0
    %v826 = vmax.f32 %v769, 0.0
    %v827 = vmax.f32 %v772, 0.0
    %v828 = vmax.f32 %v775, 0.0
    %v829 = vmax.f32 %v778, 0.0
    %v830 = vmax.f32 %v781, 0.0
    %v831 = vmax.f32 %v784, 0.0
    %v832 = vmax.f32 %v787, 0.0
    %v833 = vmax.f32 %v790, 0.0
    %v834 = vmax.f32 %v793, 0.0
    %v835 = vmax.f32 %v796, 0.0
    %v836 = vmax.f32 %v799, 0.0
    %v837 = vmax.f32 %v802, 0.0
    %v838 = vmax.f32 %v805, 0.0
    %839 = vmatpush.msra.mxu0 %v822
    %840 = vmatpush.msra.mxu0 %v821
    %841 = vmatpush.msra.mxu0 %v820
    %842 = vmatpush.msra.mxu0 %v819
    %843 = vmatpush.msra.mxu0 %v818
    %844 = vmatpush.msra.mxu0 %v817
    %845 = vmatpush.msra.mxu0 %v816
    %846 = vmatpush.msra.mxu0 %v815
    %847 = vmatpush.msra.mxu0 %v814
    %848 = vmatpush.msra.mxu0 %v813
    %849 = vmatpush.msra.mxu0 %v812
    %850 = vmatpush.msra.mxu0 %v811
    %851 = vmatpush.msra.mxu0 %v810
    %852 = vmatpush.msra.mxu0 %v809
    %853 = vmatpush.msra.mxu0 %v808
    %854 = vmatpush.msra.mxu0 %v807
    %855 = vmatmul.f32.gmra.mxu0 %v518
    %v856 = vpop.f32.mrf.mxu0
    %v857 = vadd.f32 0.0, %v856
    %858 = vdwg.mxu0
    %859 = vmatpush.msra.mxu0 %v838
    %860 = vmatpush.msra.mxu0 %v837
    %861 = vmatpush.msra.mxu0 %v836
    %862 = vmatpush.msra.mxu0 %v835
    %863 = vmatpush.msra.mxu0 %v834
    %864 = vmatpush.msra.mxu0 %v833
    %865 = vmatpush.msra.mxu0 %v832
    %866 = vmatpush.msra.mxu0 %v831
    %867 = vmatpush.msra.mxu0 %v830
    %868 = vmatpush.msra.mxu0 %v829
    %869 = vmatpush.msra.mxu0 %v828
    %870 = vmatpush.msra.mxu0 %v827
    %871 = vmatpush.msra.mxu0 %v826
    %872 = vmatpush.msra.mxu0 %v825
    %873 = vmatpush.msra.mxu0 %v824
    %874 = vmatpush.msra.mxu0 %v823
    %875 = vmatmul.f32.gmra.mxu0 %v519
    %v876 = vpop.f32.mrf.mxu0
    %v877 = vadd.f32 %v857, %v876
    %878 = vdwg.mxu0
    %v879 = vld [vmem:[#allocation5 + $0x30] sm:$0xff]
    %v880 = vmul.f32 %v565, 1.0086906
    %v881 = vmul.f32 %v877, 0.07126854
    %v882 = vsub.f32 %v880, %v881
    %v883 = vmul.f32 %v879, 0.13098527
    %v884 = vadd.f32 %v882, %v883
    %885 = vset.pattern.permute.xlu0 5
    %886 = vperm.xlu0 %885, %v84
    %v887 = vpop.permute.xlu0 %886
    %889 = vset.pattern.permute.xlu0 5
    %890 = vperm.xlu0 %889, %v85
    %v891 = vpop.permute.xlu0 %890
    %893 = vset.pattern.permute.xlu0 5
    %894 = vperm.xlu0 %893, %v86
    %v895 = vpop.permute.xlu0 %894
    %897 = vset.pattern.permute.xlu0 5
    %898 = vperm.xlu0 %897, %v87
    %v899 = vpop.permute.xlu0 %898
    %901 = vset.pattern.permute.xlu0 5
    %902 = vperm.xlu0 %901, %v88
    %v903 = vpop.permute.xlu0 %902
    %905 = vset.pattern.permute.xlu0 5
    %906 = vperm.xlu0 %905, %v89
    %v907 = vpop.permute.xlu0 %906
    %909 = vset.pattern.permute.xlu0 5
    %910 = vperm.xlu0 %909, %v90
    %v911 = vpop.permute.xlu0 %910
    %913 = vset.pattern.permute.xlu0 5
    %914 = vperm.xlu0 %913, %v91
    %v915 = vpop.permute.xlu0 %914
    %917 = vset.pattern.permute.xlu0 5
    %918 = vperm.xlu0 %917, %v92
    %v919 = vpop.permute.xlu0 %918
    %921 = vset.pattern.permute.xlu0 5
    %922 = vperm.xlu0 %921, %v93
    %v923 = vpop.permute.xlu0 %922
    %925 = vset.pattern.permute.xlu0 5
    %926 = vperm.xlu0 %925, %v94
    %v927 = vpop.permute.xlu0 %926
    %929 = vset.pattern.permute.xlu0 5
    %930 = vperm.xlu0 %929, %v95
    %v931 = vpop.permute.xlu0 %930
    %933 = vset.pattern.permute.xlu0 5
    %934 = vperm.xlu0 %933, %v96
    %v935 = vpop.permute.xlu0 %934
    %937 = vset.pattern.permute.xlu0 5
    %938 = vperm.xlu0 %937, %v97
    %v939 = vpop.permute.xlu0 %938
    %941 = vset.pattern.permute.xlu0 5
    %942 = vperm.xlu0 %941, %v98
    %v943 = vpop.permute.xlu0 %942
    %945 = vset.pattern.permute.xlu0 5
    %946 = vperm.xlu0 %945, %v99
    %v947 = vpop.permute.xlu0 %946
    %949 = vset.pattern.permute.xlu0 5
    %950 = vperm.xlu0 %949, %v100
    %v951 = vpop.permute.xlu0 %950
    %953 = vset.pattern.permute.xlu0 5
    %954 = vperm.xlu0 %953, %v101
    %v955 = vpop.permute.xlu0 %954
    %957 = vset.pattern.permute.xlu0 5
    %958 = vperm.xlu0 %957, %v102
    %v959 = vpop.permute.xlu0 %958
    %961 = vset.pattern.permute.xlu0 5
    %962 = vperm.xlu0 %961, %v103
    %v963 = vpop.permute.xlu0 %962
    %965 = vset.pattern.permute.xlu0 5
    %966 = vperm.xlu0 %965, %v104
    %v967 = vpop.permute.xlu0 %966
    %969 = vset.pattern.permute.xlu0 5
    %970 = vperm.xlu0 %969, %v105
    %v971 = vpop.permute.xlu0 %970
    %973 = vset.pattern.permute.xlu0 5
    %974 = vperm.xlu0 %973, %v106
    %v975 = vpop.permute.xlu0 %974
    %977 = vset.pattern.permute.xlu0 5
    %978 = vperm.xlu0 %977, %v107
    %v979 = vpop.permute.xlu0 %978
    %981 = vset.pattern.permute.xlu0 5
    %982 = vperm.xlu0 %981, %v108
    %v983 = vpop.permute.xlu0 %982
    %985 = vset.pattern.permute.xlu0 5
    %986 = vperm.xlu0 %985, %v109
    %v987 = vpop.permute.xlu0 %986
    %989 = vset.pattern.permute.xlu0 5
    %990 = vperm.xlu0 %989, %v110
    %v991 = vpop.permute.xlu0 %990
    %993 = vset.pattern.permute.xlu0 5
    %994 = vperm.xlu0 %993, %v111
    %v995 = vpop.permute.xlu0 %994
    %997 = vset.pattern.permute.xlu0 5
    %998 = vperm.xlu0 %997, %v112
    %v999 = vpop.permute.xlu0 %998
    %1001 = vset.pattern.permute.xlu0 5
    %1002 = vperm.xlu0 %1001, %v113
    %v1003 = vpop.permute.xlu0 %1002
    %1005 = vset.pattern.permute.xlu0 5
    %1006 = vperm.xlu0 %1005, %v114
    %v1007 = vpop.permute.xlu0 %1006
    %1009 = vset.pattern.permute.xlu0 5
    %1010 = vperm.xlu0 %1009, %v115
    %v1011 = vpop.permute.xlu0 %1010
    %1013 = vmatpush.msra.mxu0 0.0
    %1014 = vmatpush.msra.mxu0 0.0
    %1015 = vmatpush.msra.mxu0 0.0
    %1016 = vmatpush.msra.mxu0 0.0
    %1017 = vmatpush.msra.mxu0 0.0
    %1018 = vmatpush.msra.mxu0 0.0
    %1019 = vmatpush.msra.mxu0 0.0
    %1020 = vmatpush.msra.mxu0 0.0
    %1021 = vmatpush.msra.mxu0 0.0
    %1022 = vmatpush.msra.mxu0 0.0
    %1023 = vmatpush.msra.mxu0 0.0
    %1024 = vmatpush.msra.mxu0 0.0
    %1025 = vmatpush.msra.mxu0 0.0
    %1026 = vmatpush.msra.mxu0 0.0
    %1027 = vmatpush.msra.mxu0 0.0
    %1028 = vmatpush.msra.mxu0 %v884
    %1029 = vmatmul.f32.gmra.mxu0 %v278
    %v1030 = vpop.f32.mrf.mxu0
    %v1031 = vadd.f32 %v887, %v1030
    %1032 = vmatmul.f32.gmra.mxu0 %v281
    %v1033 = vpop.f32.mrf.mxu0
    %v1034 = vadd.f32 %v891, %v1033
    %1035 = vmatmul.f32.gmra.mxu0 %v284
    %v1036 = vpop.f32.mrf.mxu0
    %v1037 = vadd.f32 %v895, %v1036
    %1038 = vmatmul.f32.gmra.mxu0 %v287
    %v1039 = vpop.f32.mrf.mxu0
    %v1040 = vadd.f32 %v899, %v1039
    %1041 = vmatmul.f32.gmra.mxu0 %v290
    %v1042 = vpop.f32.mrf.mxu0
    %v1043 = vadd.f32 %v903, %v1042
    %1044 = vmatmul.f32.gmra.mxu0 %v293
    %v1045 = vpop.f32.mrf.mxu0
    %v1046 = vadd.f32 %v907, %v1045
    %1047 = vmatmul.f32.gmra.mxu0 %v296
    %v1048 = vpop.f32.mrf.mxu0
    %v1049 = vadd.f32 %v911, %v1048
    %1050 = vmatmul.f32.gmra.mxu0 %v299
    %v1051 = vpop.f32.mrf.mxu0
    %v1052 = vadd.f32 %v915, %v1051
    %1053 = vmatmul.f32.gmra.mxu0 %v302
    %v1054 = vpop.f32.mrf.mxu0
    %v1055 = vadd.f32 %v919, %v1054
    %1056 = vmatmul.f32.gmra.mxu0 %v305
    %v1057 = vpop.f32.mrf.mxu0
    %v1058 = vadd.f32 %v923, %v1057
    %1059 = vmatmul.f32.gmra.mxu0 %v308
    %v1060 = vpop.f32.mrf.mxu0
    %v1061 = vadd.f32 %v927, %v1060
    %1062 = vmatmul.f32.gmra.mxu0 %v311
    %v1063 = vpop.f32.mrf.mxu0
    %v1064 = vadd.f32 %v931, %v1063
    %1065 = vmatmul.f32.gmra.mxu0 %v314
    %v1066 = vpop.f32.mrf.mxu0
    %v1067 = vadd.f32 %v935, %v1066
    %1068 = vmatmul.f32.gmra.mxu0 %v317
    %v1069 = vpop.f32.mrf.mxu0
    %v1070 = vadd.f32 %v939, %v1069
    %1071 = vmatmul.f32.gmra.mxu0 %v320
    %v1072 = vpop.f32.mrf.mxu0
    %v1073 = vadd.f32 %v943, %v1072
    %1074 = vmatmul.f32.gmra.mxu0 %v323
    %v1075 = vpop.f32.mrf.mxu0
    %v1076 = vadd.f32 %v947, %v1075
    %1077 = vmatmul.f32.gmra.mxu0 %v326
    %v1078 = vpop.f32.mrf.mxu0
    %v1079 = vadd.f32 %v951, %v1078
    %1080 = vmatmul.f32.gmra.mxu0 %v329
    %v1081 = vpop.f32.mrf.mxu0
    %v1082 = vadd.f32 %v955, %v1081
    %1083 = vmatmul.f32.gmra.mxu0 %v332
    %v1084 = vpop.f32.mrf.mxu0
    %v1085 = vadd.f32 %v959, %v1084
    %1086 = vmatmul.f32.gmra.mxu0 %v335
    %v1087 = vpop.f32.mrf.mxu0
    %v1088 = vadd.f32 %v963, %v1087
    %1089 = vmatmul.f32.gmra.mxu0 %v338
    %v1090 = vpop.f32.mrf.mxu0
    %v1091 = vadd.f32 %v967, %v1090
    %1092 = vmatmul.f32.gmra.mxu0 %v341
    %v1093 = vpop.f32.mrf.mxu0
    %v1094 = vadd.f32 %v971, %v1093
    %1095 = vmatmul.f32.gmra.mxu0 %v344
    %v1096 = vpop.f32.mrf.mxu0
    %v1097 = vadd.f32 %v975, %v1096
    %1098 = vmatmul.f32.gmra.mxu0 %v347
    %v1099 = vpop.f32.mrf.mxu0
    %v1100 = vadd.f32 %v979, %v1099
    %1101 = vmatmul.f32.gmra.mxu0 %v350
    %v1102 = vpop.f32.mrf.mxu0
    %v1103 = vadd.f32 %v983, %v1102
    %1104 = vmatmul.f32.gmra.mxu0 %v353
    %v1105 = vpop.f32.mrf.mxu0
    %v1106 = vadd.f32 %v987, %v1105
    %1107 = vmatmul.f32.gmra.mxu0 %v356
    %v1108 = vpop.f32.mrf.mxu0
    %v1109 = vadd.f32 %v991, %v1108
    %1110 = vmatmul.f32.gmra.mxu0 %v359
    %v1111 = vpop.f32.mrf.mxu0
    %v1112 = vadd.f32 %v995, %v1111
    %1113 = vmatmul.f32.gmra.mxu0 %v362
    %v1114 = vpop.f32.mrf.mxu0
    %v1115 = vadd.f32 %v999, %v1114
    %1116 = vmatmul.f32.gmra.mxu0 %v365
    %v1117 = vpop.f32.mrf.mxu0
    %v1118 = vadd.f32 %v1003, %v1117
    %1119 = vmatmul.f32.gmra.mxu0 %v368
    %v1120 = vpop.f32.mrf.mxu0
    %v1121 = vadd.f32 %v1007, %v1120
    %1122 = vmatmul.f32.gmra.mxu0 %v371
    %v1123 = vpop.f32.mrf.mxu0
    %v1124 = vadd.f32 %v1011, %v1123
    %1125 = vdwg.mxu0
    %v1126 = vmax.f32 %v1031, 0.0
    %v1127 = vmax.f32 %v1034, 0.0
    %v1128 = vmax.f32 %v1037, 0.0
    %v1129 = vmax.f32 %v1040, 0.0
    %v1130 = vmax.f32 %v1043, 0.0
    %v1131 = vmax.f32 %v1046, 0.0
    %v1132 = vmax.f32 %v1049, 0.0
    %v1133 = vmax.f32 %v1052, 0.0
    %v1134 = vmax.f32 %v1055, 0.0
    %v1135 = vmax.f32 %v1058, 0.0
    %v1136 = vmax.f32 %v1061, 0.0
    %v1137 = vmax.f32 %v1064, 0.0
    %v1138 = vmax.f32 %v1067, 0.0
    %v1139 = vmax.f32 %v1070, 0.0
    %v1140 = vmax.f32 %v1073, 0.0
    %v1141 = vmax.f32 %v1076, 0.0
    %v1142 = vmax.f32 %v1079, 0.0
    %v1143 = vmax.f32 %v1082, 0.0
    %v1144 = vmax.f32 %v1085, 0.0
    %v1145 = vmax.f32 %v1088, 0.0
    %v1146 = vmax.f32 %v1091, 0.0
    %v1147 = vmax.f32 %v1094, 0.0
    %v1148 = vmax.f32 %v1097, 0.0
    %v1149 = vmax.f32 %v1100, 0.0
    %v1150 = vmax.f32 %v1103, 0.0
    %v1151 = vmax.f32 %v1106, 0.0
    %v1152 = vmax.f32 %v1109, 0.0
    %v1153 = vmax.f32 %v1112, 0.0
    %v1154 = vmax.f32 %v1115, 0.0
    %v1155 = vmax.f32 %v1118, 0.0
    %v1156 = vmax.f32 %v1121, 0.0
    %v1157 = vmax.f32 %v1124, 0.0
    %1158 = vmatpush.msra.mxu0 %v1141
    %1159 = vmatpush.msra.mxu0 %v1140
    %1160 = vmatpush.msra.mxu0 %v1139
    %1161 = vmatpush.msra.mxu0 %v1138
    %1162 = vmatpush.msra.mxu0 %v1137
    %1163 = vmatpush.msra.mxu0 %v1136
    %1164 = vmatpush.msra.mxu0 %v1135
    %1165 = vmatpush.msra.mxu0 %v1134
    %1166 = vmatpush.msra.mxu0 %v1133
    %1167 = vmatpush.msra.mxu0 %v1132
    %1168 = vmatpush.msra.mxu0 %v1131
    %1169 = vmatpush.msra.mxu0 %v1130
    %1170 = vmatpush.msra.mxu0 %v1129
    %1171 = vmatpush.msra.mxu0 %v1128
    %1172 = vmatpush.msra.mxu0 %v1127
    %1173 = vmatpush.msra.mxu0 %v1126
    %1174 = vmatmul.f32.gmra.mxu0 %v518
    %v1175 = vpop.f32.mrf.mxu0
    %v1176 = vadd.f32 0.0, %v1175
    %1177 = vdwg.mxu0
    %1178 = vmatpush.msra.mxu0 %v1157
    %1179 = vmatpush.msra.mxu0 %v1156
    %1180 = vmatpush.msra.mxu0 %v1155
    %1181 = vmatpush.msra.mxu0 %v1154
    %1182 = vmatpush.msra.mxu0 %v1153
    %1183 = vmatpush.msra.mxu0 %v1152
    %1184 = vmatpush.msra.mxu0 %v1151
    %1185 = vmatpush.msra.mxu0 %v1150
    %1186 = vmatpush.msra.mxu0 %v1149
    %1187 = vmatpush.msra.mxu0 %v1148
    %1188 = vmatpush.msra.mxu0 %v1147
    %1189 = vmatpush.msra.mxu0 %v1146
    %1190 = vmatpush.msra.mxu0 %v1145
    %1191 = vmatpush.msra.mxu0 %v1144
    %1192 = vmatpush.msra.mxu0 %v1143
    %1193 = vmatpush.msra.mxu0 %v1142
    %1194 = vmatmul.f32.gmra.mxu0 %v519
    %v1195 = vpop.f32.mrf.mxu0
    %v1196 = vadd.f32 %v1176, %v1195
    %1197 = vdwg.mxu0
    %v1198 = vld [vmem:[#allocation5 + $0x28] sm:$0xff]
    %v1199 = vmul.f32 %v884, 1.0072349
    %v1200 = vmul.f32 %v1196, 0.06990407
    %v1201 = vsub.f32 %v1199, %v1200
    %v1202 = vmul.f32 %v1198, 0.119642325
    %v1203 = vadd.f32 %v1201, %v1202
    %1204 = vset.pattern.permute.xlu0 4
    %1205 = vperm.xlu0 %1204, %v84
    %v1206 = vpop.permute.xlu0 %1205
    %1208 = vset.pattern.permute.xlu0 4
    %1209 = vperm.xlu0 %1208, %v85
    %v1210 = vpop.permute.xlu0 %1209
    %1212 = vset.pattern.permute.xlu0 4
    %1213 = vperm.xlu0 %1212, %v86
    %v1214 = vpop.permute.xlu0 %1213
    %1216 = vset.pattern.permute.xlu0 4
    %1217 = vperm.xlu0 %1216, %v87
    %v1218 = vpop.permute.xlu0 %1217
    %1220 = vset.pattern.permute.xlu0 4
    %1221 = vperm.xlu0 %1220, %v88
    %v1222 = vpop.permute.xlu0 %1221
    %1224 = vset.pattern.permute.xlu0 4
    %1225 = vperm.xlu0 %1224, %v89
    %v1226 = vpop.permute.xlu0 %1225
    %1228 = vset.pattern.permute.xlu0 4
    %1229 = vperm.xlu0 %1228, %v90
    %v1230 = vpop.permute.xlu0 %1229
    %1232 = vset.pattern.permute.xlu0 4
    %1233 = vperm.xlu0 %1232, %v91
    %v1234 = vpop.permute.xlu0 %1233
    %1236 = vset.pattern.permute.xlu0 4
    %1237 = vperm.xlu0 %1236, %v92
    %v1238 = vpop.permute.xlu0 %1237
    %1240 = vset.pattern.permute.xlu0 4
    %1241 = vperm.xlu0 %1240, %v93
    %v1242 = vpop.permute.xlu0 %1241
    %1244 = vset.pattern.permute.xlu0 4
    %1245 = vperm.xlu0 %1244, %v94
    %v1246 = vpop.permute.xlu0 %1245
    %1248 = vset.pattern.permute.xlu0 4
    %1249 = vperm.xlu0 %1248, %v95
    %v1250 = vpop.permute.xlu0 %1249
    %1252 = vset.pattern.permute.xlu0 4
    %1253 = vperm.xlu0 %1252, %v96
    %v1254 = vpop.permute.xlu0 %1253
    %1256 = vset.pattern.permute.xlu0 4
    %1257 = vperm.xlu0 %1256, %v97
    %v1258 = vpop.permute.xlu0 %1257
    %1260 = vset.pattern.permute.xlu0 4
    %1261 = vperm.xlu0 %1260, %v98
    %v1262 = vpop.permute.xlu0 %1261
    %1264 = vset.pattern.permute.xlu0 4
    %1265 = vperm.xlu0 %1264, %v99
    %v1266 = vpop.permute.xlu0 %1265
    %1268 = vset.pattern.permute.xlu0 4
    %1269 = vperm.xlu0 %1268, %v100
    %v1270 = vpop.permute.xlu0 %1269
    %1272 = vset.pattern.permute.xlu0 4
    %1273 = vperm.xlu0 %1272, %v101
    %v1274 = vpop.permute.xlu0 %1273
    %1276 = vset.pattern.permute.xlu0 4
    %1277 = vperm.xlu0 %1276, %v102
    %v1278 = vpop.permute.xlu0 %1277
    %1280 = vset.pattern.permute.xlu0 4
    %1281 = vperm.xlu0 %1280, %v103
    %v1282 = vpop.permute.xlu0 %1281
    %1284 = vset.pattern.permute.xlu0 4
    %1285 = vperm.xlu0 %1284, %v104
    %v1286 = vpop.permute.xlu0 %1285
    %1288 = vset.pattern.permute.xlu0 4
    %1289 = vperm.xlu0 %1288, %v105
    %v1290 = vpop.permute.xlu0 %1289
    %1292 = vset.pattern.permute.xlu0 4
    %1293 = vperm.xlu0 %1292, %v106
    %v1294 = vpop.permute.xlu0 %1293
    %1296 = vset.pattern.permute.xlu0 4
    %1297 = vperm.xlu0 %1296, %v107
    %v1298 = vpop.permute.xlu0 %1297
    %1300 = vset.pattern.permute.xlu0 4
    %1301 = vperm.xlu0 %1300, %v108
    %v1302 = vpop.permute.xlu0 %1301
    %1304 = vset.pattern.permute.xlu0 4
    %1305 = vperm.xlu0 %1304, %v109
    %v1306 = vpop.permute.xlu0 %1305
    %1308 = vset.pattern.permute.xlu0 4
    %1309 = vperm.xlu0 %1308, %v110
    %v1310 = vpop.permute.xlu0 %1309
    %1312 = vset.pattern.permute.xlu0 4
    %1313 = vperm.xlu0 %1312, %v111
    %v1314 = vpop.permute.xlu0 %1313
    %1316 = vset.pattern.permute.xlu0 4
    %1317 = vperm.xlu0 %1316, %v112
    %v1318 = vpop.permute.xlu0 %1317
    %1320 = vset.pattern.permute.xlu0 4
    %1321 = vperm.xlu0 %1320, %v113
    %v1322 = vpop.permute.xlu0 %1321
    %1324 = vset.pattern.permute.xlu0 4
    %1325 = vperm.xlu0 %1324, %v114
    %v1326 = vpop.permute.xlu0 %1325
    %1328 = vset.pattern.permute.xlu0 4
    %1329 = vperm.xlu0 %1328, %v115
    %v1330 = vpop.permute.xlu0 %1329
    %1332 = vmatpush.msra.mxu0 0.0
    %1333 = vmatpush.msra.mxu0 0.0
    %1334 = vmatpush.msra.mxu0 0.0
    %1335 = vmatpush.msra.mxu0 0.0
    %1336 = vmatpush.msra.mxu0 0.0
    %1337 = vmatpush.msra.mxu0 0.0
    %1338 = vmatpush.msra.mxu0 0.0
    %1339 = vmatpush.msra.mxu0 0.0
    %1340 = vmatpush.msra.mxu0 0.0
    %1341 = vmatpush.msra.mxu0 0.0
    %1342 = vmatpush.msra.mxu0 0.0
    %1343 = vmatpush.msra.mxu0 0.0
    %1344 = vmatpush.msra.mxu0 0.0
    %1345 = vmatpush.msra.mxu0 0.0
    %1346 = vmatpush.msra.mxu0 0.0
    %1347 = vmatpush.msra.mxu0 %v1203
    %1348 = vmatmul.f32.gmra.mxu0 %v278
    %v1349 = vpop.f32.mrf.mxu0
    %v1350 = vadd.f32 %v1206, %v1349
    %1351 = vmatmul.f32.gmra.mxu0 %v281
    %v1352 = vpop.f32.mrf.mxu0
    %v1353 = vadd.f32 %v1210, %v1352
    %1354 = vmatmul.f32.gmra.mxu0 %v284
    %v1355 = vpop.f32.mrf.mxu0
    %v1356 = vadd.f32 %v1214, %v1355
    %1357 = vmatmul.f32.gmra.mxu0 %v287
    %v1358 = vpop.f32.mrf.mxu0
    %v1359 = vadd.f32 %v1218, %v1358
    %1360 = vmatmul.f32.gmra.mxu0 %v290
    %v1361 = vpop.f32.mrf.mxu0
    %v1362 = vadd.f32 %v1222, %v1361
    %1363 = vmatmul.f32.gmra.mxu0 %v293
    %v1364 = vpop.f32.mrf.mxu0
    %v1365 = vadd.f32 %v1226, %v1364
    %1366 = vmatmul.f32.gmra.mxu0 %v296
    %v1367 = vpop.f32.mrf.mxu0
    %v1368 = vadd.f32 %v1230, %v1367
    %1369 = vmatmul.f32.gmra.mxu0 %v299
    %v1370 = vpop.f32.mrf.mxu0
    %v1371 = vadd.f32 %v1234, %v1370
    %1372 = vmatmul.f32.gmra.mxu0 %v302
    %v1373 = vpop.f32.mrf.mxu0
    %v1374 = vadd.f32 %v1238, %v1373
    %1375 = vmatmul.f32.gmra.mxu0 %v305
    %v1376 = vpop.f32.mrf.mxu0
    %v1377 = vadd.f32 %v1242, %v1376
    %1378 = vmatmul.f32.gmra.mxu0 %v308
    %v1379 = vpop.f32.mrf.mxu0
    %v1380 = vadd.f32 %v1246, %v1379
    %1381 = vmatmul.f32.gmra.mxu0 %v311
    %v1382 = vpop.f32.mrf.mxu0
    %v1383 = vadd.f32 %v1250, %v1382
    %1384 = vmatmul.f32.gmra.mxu0 %v314
    %v1385 = vpop.f32.mrf.mxu0
    %v1386 = vadd.f32 %v1254, %v1385
    %1387 = vmatmul.f32.gmra.mxu0 %v317
    %v1388 = vpop.f32.mrf.mxu0
    %v1389 = vadd.f32 %v1258, %v1388
    %1390 = vmatmul.f32.gmra.mxu0 %v320
    %v1391 = vpop.f32.mrf.mxu0
    %v1392 = vadd.f32 %v1262, %v1391
    %1393 = vmatmul.f32.gmra.mxu0 %v323
    %v1394 = vpop.f32.mrf.mxu0
    %v1395 = vadd.f32 %v1266, %v1394
    %1396 = vmatmul.f32.gmra.mxu0 %v326
    %v1397 = vpop.f32.mrf.mxu0
    %v1398 = vadd.f32 %v1270, %v1397
    %1399 = vmatmul.f32.gmra.mxu0 %v329
    %v1400 = vpop.f32.mrf.mxu0
    %v1401 = vadd.f32 %v1274, %v1400
    %1402 = vmatmul.f32.gmra.mxu0 %v332
    %v1403 = vpop.f32.mrf.mxu0
    %v1404 = vadd.f32 %v1278, %v1403
    %1405 = vmatmul.f32.gmra.mxu0 %v335
    %v1406 = vpop.f32.mrf.mxu0
    %v1407 = vadd.f32 %v1282, %v1406
    %1408 = vmatmul.f32.gmra.mxu0 %v338
    %v1409 = vpop.f32.mrf.mxu0
    %v1410 = vadd.f32 %v1286, %v1409
    %1411 = vmatmul.f32.gmra.mxu0 %v341
    %v1412 = vpop.f32.mrf.mxu0
    %v1413 = vadd.f32 %v1290, %v1412
    %1414 = vmatmul.f32.gmra.mxu0 %v344
    %v1415 = vpop.f32.mrf.mxu0
    %v1416 = vadd.f32 %v1294, %v1415
    %1417 = vmatmul.f32.gmra.mxu0 %v347
    %v1418 = vpop.f32.mrf.mxu0
    %v1419 = vadd.f32 %v1298, %v1418
    %1420 = vmatmul.f32.gmra.mxu0 %v350
    %v1421 = vpop.f32.mrf.mxu0
    %v1422 = vadd.f32 %v1302, %v1421
    %1423 = vmatmul.f32.gmra.mxu0 %v353
    %v1424 = vpop.f32.mrf.mxu0
    %v1425 = vadd.f32 %v1306, %v1424
    %1426 = vmatmul.f32.gmra.mxu0 %v356
    %v1427 = vpop.f32.mrf.mxu0
    %v1428 = vadd.f32 %v1310, %v1427
    %1429 = vmatmul.f32.gmra.mxu0 %v359
    %v1430 = vpop.f32.mrf.mxu0
    %v1431 = vadd.f32 %v1314, %v1430
    %1432 = vmatmul.f32.gmra.mxu0 %v362
    %v1433 = vpop.f32.mrf.mxu0
    %v1434 = vadd.f32 %v1318, %v1433
    %1435 = vmatmul.f32.gmra.mxu0 %v365
    %v1436 = vpop.f32.mrf.mxu0
    %v1437 = vadd.f32 %v1322, %v1436
    %1438 = vmatmul.f32.gmra.mxu0 %v368
    %v1439 = vpop.f32.mrf.mxu0
    %v1440 = vadd.f32 %v1326, %v1439
    %1441 = vmatmul.f32.gmra.mxu0 %v371
    %v1442 = vpop.f32.mrf.mxu0
    %v1443 = vadd.f32 %v1330, %v1442
    %1444 = vdwg.mxu0
    %v1445 = vmax.f32 %v1350, 0.0
    %v1446 = vmax.f32 %v1353, 0.0
    %v1447 = vmax.f32 %v1356, 0.0
    %v1448 = vmax.f32 %v1359, 0.0
    %v1449 = vmax.f32 %v1362, 0.0
    %v1450 = vmax.f32 %v1365, 0.0
    %v1451 = vmax.f32 %v1368, 0.0
    %v1452 = vmax.f32 %v1371, 0.0
    %v1453 = vmax.f32 %v1374, 0.0
    %v1454 = vmax.f32 %v1377, 0.0
    %v1455 = vmax.f32 %v1380, 0.0
    %v1456 = vmax.f32 %v1383, 0.0
    %v1457 = vmax.f32 %v1386, 0.0
    %v1458 = vmax.f32 %v1389, 0.0
    %v1459 = vmax.f32 %v1392, 0.0
    %v1460 = vmax.f32 %v1395, 0.0
    %v1461 = vmax.f32 %v1398, 0.0
    %v1462 = vmax.f32 %v1401, 0.0
    %v1463 = vmax.f32 %v1404, 0.0
    %v1464 = vmax.f32 %v1407, 0.0
    %v1465 = vmax.f32 %v1410, 0.0
    %v1466 = vmax.f32 %v1413, 0.0
    %v1467 = vmax.f32 %v1416, 0.0
    %v1468 = vmax.f32 %v1419, 0.0
    %v1469 = vmax.f32 %v1422, 0.0
    %v1470 = vmax.f32 %v1425, 0.0
    %v1471 = vmax.f32 %v1428, 0.0
    %v1472 = vmax.f32 %v1431, 0.0
    %v1473 = vmax.f32 %v1434, 0.0
    %v1474 = vmax.f32 %v1437, 0.0
    %v1475 = vmax.f32 %v1440, 0.0
    %v1476 = vmax.f32 %v1443, 0.0
    %1477 = vmatpush.msra.mxu0 %v1460
    %1478 = vmatpush.msra.mxu0 %v1459
    %1479 = vmatpush.msra.mxu0 %v1458
    %1480 = vmatpush.msra.mxu0 %v1457
    %1481 = vmatpush.msra.mxu0 %v1456
    %1482 = vmatpush.msra.mxu0 %v1455
    %1483 = vmatpush.msra.mxu0 %v1454
    %1484 = vmatpush.msra.mxu0 %v1453
    %1485 = vmatpush.msra.mxu0 %v1452
    %1486 = vmatpush.msra.mxu0 %v1451
    %1487 = vmatpush.msra.mxu0 %v1450
    %1488 = vmatpush.msra.mxu0 %v1449
    %1489 = vmatpush.msra.mxu0 %v1448
    %1490 = vmatpush.msra.mxu0 %v1447
    %1491 = vmatpush.msra.mxu0 %v1446
    %1492 = vmatpush.msra.mxu0 %v1445
    %1493 = vmatmul.f32.gmra.mxu0 %v518
    %v1494 = vpop.f32.mrf.mxu0
    %v1495 = vadd.f32 0.0, %v1494
    %1496 = vdwg.mxu0
    %1497 = vmatpush.msra.mxu0 %v1476
    %1498 = vmatpush.msra.mxu0 %v1475
    %1499 = vmatpush.msra.mxu0 %v1474
    %1500 = vmatpush.msra.mxu0 %v1473
    %1501 = vmatpush.msra.mxu0 %v1472
    %1502 = vmatpush.msra.mxu0 %v1471
    %1503 = vmatpush.msra.mxu0 %v1470
    %1504 = vmatpush.msra.mxu0 %v1469
    %1505 = vmatpush.msra.mxu0 %v1468
    %1506 = vmatpush.msra.mxu0 %v1467
    %1507 = vmatpush.msra.mxu0 %v1466
    %1508 = vmatpush.msra.mxu0 %v1465
    %1509 = vmatpush.msra.mxu0 %v1464
    %1510 = vmatpush.msra.mxu0 %v1463
    %1511 = vmatpush.msra.mxu0 %v1462
    %1512 = vmatpush.msra.mxu0 %v1461
    %1513 = vmatmul.f32.gmra.mxu0 %v519
    %v1514 = vpop.f32.mrf.mxu0
    %v1515 = vadd.f32 %v1495, %v1514
    %1516 = vdwg.mxu0
    %v1517 = vld [vmem:[#allocation5 + $0x20] sm:$0xff]
    %v1518 = vmul.f32 %v1203, 1.0057856
    %v1519 = vmul.f32 %v1515, 0.068182155
    %v1520 = vsub.f32 %v1518, %v1519
    %v1521 = vmul.f32 %v1517, 0.107104756
    %v1522 = vadd.f32 %v1520, %v1521
    %1523 = vset.pattern.permute.xlu0 3
    %1524 = vperm.xlu0 %1523, %v84
    %v1525 = vpop.permute.xlu0 %1524
    %1527 = vset.pattern.permute.xlu0 3
    %1528 = vperm.xlu0 %1527, %v85
    %v1529 = vpop.permute.xlu0 %1528
    %1531 = vset.pattern.permute.xlu0 3
    %1532 = vperm.xlu0 %1531, %v86
    %v1533 = vpop.permute.xlu0 %1532
    %1535 = vset.pattern.permute.xlu0 3
    %1536 = vperm.xlu0 %1535, %v87
    %v1537 = vpop.permute.xlu0 %1536
    %1539 = vset.pattern.permute.xlu0 3
    %1540 = vperm.xlu0 %1539, %v88
    %v1541 = vpop.permute.xlu0 %1540
    %1543 = vset.pattern.permute.xlu0 3
    %1544 = vperm.xlu0 %1543, %v89
    %v1545 = vpop.permute.xlu0 %1544
    %1547 = vset.pattern.permute.xlu0 3
    %1548 = vperm.xlu0 %1547, %v90
    %v1549 = vpop.permute.xlu0 %1548
    %1551 = vset.pattern.permute.xlu0 3
    %1552 = vperm.xlu0 %1551, %v91
    %v1553 = vpop.permute.xlu0 %1552
    %1555 = vset.pattern.permute.xlu0 3
    %1556 = vperm.xlu0 %1555, %v92
    %v1557 = vpop.permute.xlu0 %1556
    %1559 = vset.pattern.permute.xlu0 3
    %1560 = vperm.xlu0 %1559, %v93
    %v1561 = vpop.permute.xlu0 %1560
    %1563 = vset.pattern.permute.xlu0 3
    %1564 = vperm.xlu0 %1563, %v94
    %v1565 = vpop.permute.xlu0 %1564
    %1567 = vset.pattern.permute.xlu0 3
    %1568 = vperm.xlu0 %1567, %v95
    %v1569 = vpop.permute.xlu0 %1568
    %1571 = vset.pattern.permute.xlu0 3
    %1572 = vperm.xlu0 %1571, %v96
    %v1573 = vpop.permute.xlu0 %1572
    %1575 = vset.pattern.permute.xlu0 3
    %1576 = vperm.xlu0 %1575, %v97
    %v1577 = vpop.permute.xlu0 %1576
    %1579 = vset.pattern.permute.xlu0 3
    %1580 = vperm.xlu0 %1579, %v98
    %v1581 = vpop.permute.xlu0 %1580
    %1583 = vset.pattern.permute.xlu0 3
    %1584 = vperm.xlu0 %1583, %v99
    %v1585 = vpop.permute.xlu0 %1584
    %1587 = vset.pattern.permute.xlu0 3
    %1588 = vperm.xlu0 %1587, %v100
    %v1589 = vpop.permute.xlu0 %1588
    %1591 = vset.pattern.permute.xlu0 3
    %1592 = vperm.xlu0 %1591, %v101
    %v1593 = vpop.permute.xlu0 %1592
    %1595 = vset.pattern.permute.xlu0 3
    %1596 = vperm.xlu0 %1595, %v102
    %v1597 = vpop.permute.xlu0 %1596
    %1599 = vset.pattern.permute.xlu0 3
    %1600 = vperm.xlu0 %1599, %v103
    %v1601 = vpop.permute.xlu0 %1600
    %1603 = vset.pattern.permute.xlu0 3
    %1604 = vperm.xlu0 %1603, %v104
    %v1605 = vpop.permute.xlu0 %1604
    %1607 = vset.pattern.permute.xlu0 3
    %1608 = vperm.xlu0 %1607, %v105
    %v1609 = vpop.permute.xlu0 %1608
    %1611 = vset.pattern.permute.xlu0 3
    %1612 = vperm.xlu0 %1611, %v106
    %v1613 = vpop.permute.xlu0 %1612
    %1615 = vset.pattern.permute.xlu0 3
    %1616 = vperm.xlu0 %1615, %v107
    %v1617 = vpop.permute.xlu0 %1616
    %1619 = vset.pattern.permute.xlu0 3
    %1620 = vperm.xlu0 %1619, %v108
    %v1621 = vpop.permute.xlu0 %1620
    %1623 = vset.pattern.permute.xlu0 3
    %1624 = vperm.xlu0 %1623, %v109
    %v1625 = vpop.permute.xlu0 %1624
    %1627 = vset.pattern.permute.xlu0 3
    %1628 = vperm.xlu0 %1627, %v110
    %v1629 = vpop.permute.xlu0 %1628
    %1631 = vset.pattern.permute.xlu0 3
    %1632 = vperm.xlu0 %1631, %v111
    %v1633 = vpop.permute.xlu0 %1632
    %1635 = vset.pattern.permute.xlu0 3
    %1636 = vperm.xlu0 %1635, %v112
    %v1637 = vpop.permute.xlu0 %1636
    %1639 = vset.pattern.permute.xlu0 3
    %1640 = vperm.xlu0 %1639, %v113
    %v1641 = vpop.permute.xlu0 %1640
    %1643 = vset.pattern.permute.xlu0 3
    %1644 = vperm.xlu0 %1643, %v114
    %v1645 = vpop.permute.xlu0 %1644
    %1647 = vset.pattern.permute.xlu0 3
    %1648 = vperm.xlu0 %1647, %v115
    %v1649 = vpop.permute.xlu0 %1648
    %1651 = vmatpush.msra.mxu0 0.0
    %1652 = vmatpush.msra.mxu0 0.0
    %1653 = vmatpush.msra.mxu0 0.0
    %1654 = vmatpush.msra.mxu0 0.0
    %1655 = vmatpush.msra.mxu0 0.0
    %1656 = vmatpush.msra.mxu0 0.0
    %1657 = vmatpush.msra.mxu0 0.0
    %1658 = vmatpush.msra.mxu0 0.0
    %1659 = vmatpush.msra.mxu0 0.0
    %1660 = vmatpush.msra.mxu0 0.0
    %1661 = vmatpush.msra.mxu0 0.0
    %1662 = vmatpush.msra.mxu0 0.0
    %1663 = vmatpush.msra.mxu0 0.0
    %1664 = vmatpush.msra.mxu0 0.0
    %1665 = vmatpush.msra.mxu0 0.0
    %1666 = vmatpush.msra.mxu0 %v1522
    %1667 = vmatmul.f32.gmra.mxu0 %v278
    %v1668 = vpop.f32.mrf.mxu0
    %v1669 = vadd.f32 %v1525, %v1668
    %1670 = vmatmul.f32.gmra.mxu0 %v281
    %v1671 = vpop.f32.mrf.mxu0
    %v1672 = vadd.f32 %v1529, %v1671
    %1673 = vmatmul.f32.gmra.mxu0 %v284
    %v1674 = vpop.f32.mrf.mxu0
    %v1675 = vadd.f32 %v1533, %v1674
    %1676 = vmatmul.f32.gmra.mxu0 %v287
    %v1677 = vpop.f32.mrf.mxu0
    %v1678 = vadd.f32 %v1537, %v1677
    %1679 = vmatmul.f32.gmra.mxu0 %v290
    %v1680 = vpop.f32.mrf.mxu0
    %v1681 = vadd.f32 %v1541, %v1680
    %1682 = vmatmul.f32.gmra.mxu0 %v293
    %v1683 = vpop.f32.mrf.mxu0
    %v1684 = vadd.f32 %v1545, %v1683
    %1685 = vmatmul.f32.gmra.mxu0 %v296
    %v1686 = vpop.f32.mrf.mxu0
    %v1687 = vadd.f32 %v1549, %v1686
    %1688 = vmatmul.f32.gmra.mxu0 %v299
    %v1689 = vpop.f32.mrf.mxu0
    %v1690 = vadd.f32 %v1553, %v1689
    %1691 = vmatmul.f32.gmra.mxu0 %v302
    %v1692 = vpop.f32.mrf.mxu0
    %v1693 = vadd.f32 %v1557, %v1692
    %1694 = vmatmul.f32.gmra.mxu0 %v305
    %v1695 = vpop.f32.mrf.mxu0
    %v1696 = vadd.f32 %v1561, %v1695
    %1697 = vmatmul.f32.gmra.mxu0 %v308
    %v1698 = vpop.f32.mrf.mxu0
    %v1699 = vadd.f32 %v1565, %v1698
    %1700 = vmatmul.f32.gmra.mxu0 %v311
    %v1701 = vpop.f32.mrf.mxu0
    %v1702 = vadd.f32 %v1569, %v1701
    %1703 = vmatmul.f32.gmra.mxu0 %v314
    %v1704 = vpop.f32.mrf.mxu0
    %v1705 = vadd.f32 %v1573, %v1704
    %1706 = vmatmul.f32.gmra.mxu0 %v317
    %v1707 = vpop.f32.mrf.mxu0
    %v1708 = vadd.f32 %v1577, %v1707
    %1709 = vmatmul.f32.gmra.mxu0 %v320
    %v1710 = vpop.f32.mrf.mxu0
    %v1711 = vadd.f32 %v1581, %v1710
    %1712 = vmatmul.f32.gmra.mxu0 %v323
    %v1713 = vpop.f32.mrf.mxu0
    %v1714 = vadd.f32 %v1585, %v1713
    %1715 = vmatmul.f32.gmra.mxu0 %v326
    %v1716 = vpop.f32.mrf.mxu0
    %v1717 = vadd.f32 %v1589, %v1716
    %1718 = vmatmul.f32.gmra.mxu0 %v329
    %v1719 = vpop.f32.mrf.mxu0
    %v1720 = vadd.f32 %v1593, %v1719
    %1721 = vmatmul.f32.gmra.mxu0 %v332
    %v1722 = vpop.f32.mrf.mxu0
    %v1723 = vadd.f32 %v1597, %v1722
    %1724 = vmatmul.f32.gmra.mxu0 %v335
    %v1725 = vpop.f32.mrf.mxu0
    %v1726 = vadd.f32 %v1601, %v1725
    %1727 = vmatmul.f32.gmra.mxu0 %v338
    %v1728 = vpop.f32.mrf.mxu0
    %v1729 = vadd.f32 %v1605, %v1728
    %1730 = vmatmul.f32.gmra.mxu0 %v341
    %v1731 = vpop.f32.mrf.mxu0
    %v1732 = vadd.f32 %v1609, %v1731
    %1733 = vmatmul.f32.gmra.mxu0 %v344
    %v1734 = vpop.f32.mrf.mxu0
    %v1735 = vadd.f32 %v1613, %v1734
    %1736 = vmatmul.f32.gmra.mxu0 %v347
    %v1737 = vpop.f32.mrf.mxu0
    %v1738 = vadd.f32 %v1617, %v1737
    %1739 = vmatmul.f32.gmra.mxu0 %v350
    %v1740 = vpop.f32.mrf.mxu0
    %v1741 = vadd.f32 %v1621, %v1740
    %1742 = vmatmul.f32.gmra.mxu0 %v353
    %v1743 = vpop.f32.mrf.mxu0
    %v1744 = vadd.f32 %v1625, %v1743
    %1745 = vmatmul.f32.gmra.mxu0 %v356
    %v1746 = vpop.f32.mrf.mxu0
    %v1747 = vadd.f32 %v1629, %v1746
    %1748 = vmatmul.f32.gmra.mxu0 %v359
    %v1749 = vpop.f32.mrf.mxu0
    %v1750 = vadd.f32 %v1633, %v1749
    %1751 = vmatmul.f32.gmra.mxu0 %v362
    %v1752 = vpop.f32.mrf.mxu0
    %v1753 = vadd.f32 %v1637, %v1752
    %1754 = vmatmul.f32.gmra.mxu0 %v365
    %v1755 = vpop.f32.mrf.mxu0
    %v1756 = vadd.f32 %v1641, %v1755
    %1757 = vmatmul.f32.gmra.mxu0 %v368
    %v1758 = vpop.f32.mrf.mxu0
    %v1759 = vadd.f32 %v1645, %v1758
    %1760 = vmatmul.f32.gmra.mxu0 %v371
    %v1761 = vpop.f32.mrf.mxu0
    %v1762 = vadd.f32 %v1649, %v1761
    %1763 = vdwg.mxu0
    %v1764 = vmax.f32 %v1669, 0.0
    %v1765 = vmax.f32 %v1672, 0.0
    %v1766 = vmax.f32 %v1675, 0.0
    %v1767 = vmax.f32 %v1678, 0.0
    %v1768 = vmax.f32 %v1681, 0.0
    %v1769 = vmax.f32 %v1684, 0.0
    %v1770 = vmax.f32 %v1687, 0.0
    %v1771 = vmax.f32 %v1690, 0.0
    %v1772 = vmax.f32 %v1693, 0.0
    %v1773 = vmax.f32 %v1696, 0.0
    %v1774 = vmax.f32 %v1699, 0.0
    %v1775 = vmax.f32 %v1702, 0.0
    %v1776 = vmax.f32 %v1705, 0.0
    %v1777 = vmax.f32 %v1708, 0.0
    %v1778 = vmax.f32 %v1711, 0.0
    %v1779 = vmax.f32 %v1714, 0.0
    %v1780 = vmax.f32 %v1717, 0.0
    %v1781 = vmax.f32 %v1720, 0.0
    %v1782 = vmax.f32 %v1723, 0.0
    %v1783 = vmax.f32 %v1726, 0.0
    %v1784 = vmax.f32 %v1729, 0.0
    %v1785 = vmax.f32 %v1732, 0.0
    %v1786 = vmax.f32 %v1735, 0.0
    %v1787 = vmax.f32 %v1738, 0.0
    %v1788 = vmax.f32 %v1741, 0.0
    %v1789 = vmax.f32 %v1744, 0.0
    %v1790 = vmax.f32 %v1747, 0.0
    %v1791 = vmax.f32 %v1750, 0.0
    %v1792 = vmax.f32 %v1753, 0.0
    %v1793 = vmax.f32 %v1756, 0.0
    %v1794 = vmax.f32 %v1759, 0.0
    %v1795 = vmax.f32 %v1762, 0.0
    %1796 = vmatpush.msra.mxu0 %v1779
    %1797 = vmatpush.msra.mxu0 %v1778
    %1798 = vmatpush.msra.mxu0 %v1777
    %1799 = vmatpush.msra.mxu0 %v1776
    %1800 = vmatpush.msra.mxu0 %v1775
    %1801 = vmatpush.msra.mxu0 %v1774
    %1802 = vmatpush.msra.mxu0 %v1773
    %1803 = vmatpush.msra.mxu0 %v1772
    %1804 = vmatpush.msra.mxu0 %v1771
    %1805 = vmatpush.msra.mxu0 %v1770
    %1806 = vmatpush.msra.mxu0 %v1769
    %1807 = vmatpush.msra.mxu0 %v1768
    %1808 = vmatpush.msra.mxu0 %v1767
    %1809 = vmatpush.msra.mxu0 %v1766
    %1810 = vmatpush.msra.mxu0 %v1765
    %1811 = vmatpush.msra.mxu0 %v1764
    %1812 = vmatmul.f32.gmra.mxu0 %v518
    %v1813 = vpop.f32.mrf.mxu0
    %v1814 = vadd.f32 0.0, %v1813
    %1815 = vdwg.mxu0
    %1816 = vmatpush.msra.mxu0 %v1795
    %1817 = vmatpush.msra.mxu0 %v1794
    %1818 = vmatpush.msra.mxu0 %v1793
    %1819 = vmatpush.msra.mxu0 %v1792
    %1820 = vmatpush.msra.mxu0 %v1791
    %1821 = vmatpush.msra.mxu0 %v1790
    %1822 = vmatpush.msra.mxu0 %v1789
    %1823 = vmatpush.msra.mxu0 %v1788
    %1824 = vmatpush.msra.mxu0 %v1787
    %1825 = vmatpush.msra.mxu0 %v1786
    %1826 = vmatpush.msra.mxu0 %v1785
    %1827 = vmatpush.msra.mxu0 %v1784
    %1828 = vmatpush.msra.mxu0 %v1783
    %1829 = vmatpush.msra.mxu0 %v1782
    %1830 = vmatpush.msra.mxu0 %v1781
    %1831 = vmatpush.msra.mxu0 %v1780
    %1832 = vmatmul.f32.gmra.mxu0 %v519
    %v1833 = vpop.f32.mrf.mxu0
    %v1834 = vadd.f32 %v1814, %v1833
    %1835 = vdwg.mxu0
    %v1836 = vld [vmem:[#allocation5 + $0x18] sm:$0xff]
    %v1837 = vmul.f32 %v1522, 1.0043424
    %v1838 = vmul.f32 %v1834, 0.065766625
    %v1839 = vsub.f32 %v1837, %v1838
    %v1840 = vmul.f32 %v1836, 0.092890106
    %v1841 = vadd.f32 %v1839, %v1840
    %1842 = vset.pattern.permute.xlu0 2
    %1843 = vperm.xlu0 %1842, %v84
    %v1844 = vpop.permute.xlu0 %1843
    %1846 = vset.pattern.permute.xlu0 2
    %1847 = vperm.xlu0 %1846, %v85
    %v1848 = vpop.permute.xlu0 %1847
    %1850 = vset.pattern.permute.xlu0 2
    %1851 = vperm.xlu0 %1850, %v86
    %v1852 = vpop.permute.xlu0 %1851
    %1854 = vset.pattern.permute.xlu0 2
    %1855 = vperm.xlu0 %1854, %v87
    %v1856 = vpop.permute.xlu0 %1855
    %1858 = vset.pattern.permute.xlu0 2
    %1859 = vperm.xlu0 %1858, %v88
    %v1860 = vpop.permute.xlu0 %1859
    %1862 = vset.pattern.permute.xlu0 2
    %1863 = vperm.xlu0 %1862, %v89
    %v1864 = vpop.permute.xlu0 %1863
    %1866 = vset.pattern.permute.xlu0 2
    %1867 = vperm.xlu0 %1866, %v90
    %v1868 = vpop.permute.xlu0 %1867
    %1870 = vset.pattern.permute.xlu0 2
    %1871 = vperm.xlu0 %1870, %v91
    %v1872 = vpop.permute.xlu0 %1871
    %1874 = vset.pattern.permute.xlu0 2
    %1875 = vperm.xlu0 %1874, %v92
    %v1876 = vpop.permute.xlu0 %1875
    %1878 = vset.pattern.permute.xlu0 2
    %1879 = vperm.xlu0 %1878, %v93
    %v1880 = vpop.permute.xlu0 %1879
    %1882 = vset.pattern.permute.xlu0 2
    %1883 = vperm.xlu0 %1882, %v94
    %v1884 = vpop.permute.xlu0 %1883
    %1886 = vset.pattern.permute.xlu0 2
    %1887 = vperm.xlu0 %1886, %v95
    %v1888 = vpop.permute.xlu0 %1887
    %1890 = vset.pattern.permute.xlu0 2
    %1891 = vperm.xlu0 %1890, %v96
    %v1892 = vpop.permute.xlu0 %1891
    %1894 = vset.pattern.permute.xlu0 2
    %1895 = vperm.xlu0 %1894, %v97
    %v1896 = vpop.permute.xlu0 %1895
    %1898 = vset.pattern.permute.xlu0 2
    %1899 = vperm.xlu0 %1898, %v98
    %v1900 = vpop.permute.xlu0 %1899
    %1902 = vset.pattern.permute.xlu0 2
    %1903 = vperm.xlu0 %1902, %v99
    %v1904 = vpop.permute.xlu0 %1903
    %1906 = vset.pattern.permute.xlu0 2
    %1907 = vperm.xlu0 %1906, %v100
    %v1908 = vpop.permute.xlu0 %1907
    %1910 = vset.pattern.permute.xlu0 2
    %1911 = vperm.xlu0 %1910, %v101
    %v1912 = vpop.permute.xlu0 %1911
    %1914 = vset.pattern.permute.xlu0 2
    %1915 = vperm.xlu0 %1914, %v102
    %v1916 = vpop.permute.xlu0 %1915
    %1918 = vset.pattern.permute.xlu0 2
    %1919 = vperm.xlu0 %1918, %v103
    %v1920 = vpop.permute.xlu0 %1919
    %1922 = vset.pattern.permute.xlu0 2
    %1923 = vperm.xlu0 %1922, %v104
    %v1924 = vpop.permute.xlu0 %1923
    %1926 = vset.pattern.permute.xlu0 2
    %1927 = vperm.xlu0 %1926, %v105
    %v1928 = vpop.permute.xlu0 %1927
    %1930 = vset.pattern.permute.xlu0 2
    %1931 = vperm.xlu0 %1930, %v106
    %v1932 = vpop.permute.xlu0 %1931
    %1934 = vset.pattern.permute.xlu0 2
    %1935 = vperm.xlu0 %1934, %v107
    %v1936 = vpop.permute.xlu0 %1935
    %1938 = vset.pattern.permute.xlu0 2
    %1939 = vperm.xlu0 %1938, %v108
    %v1940 = vpop.permute.xlu0 %1939
    %1942 = vset.pattern.permute.xlu0 2
    %1943 = vperm.xlu0 %1942, %v109
    %v1944 = vpop.permute.xlu0 %1943
    %1946 = vset.pattern.permute.xlu0 2
    %1947 = vperm.xlu0 %1946, %v110
    %v1948 = vpop.permute.xlu0 %1947
    %1950 = vset.pattern.permute.xlu0 2
    %1951 = vperm.xlu0 %1950, %v111
    %v1952 = vpop.permute.xlu0 %1951
    %1954 = vset.pattern.permute.xlu0 2
    %1955 = vperm.xlu0 %1954, %v112
    %v1956 = vpop.permute.xlu0 %1955
    %1958 = vset.pattern.permute.xlu0 2
    %1959 = vperm.xlu0 %1958, %v113
    %v1960 = vpop.permute.xlu0 %1959
    %1962 = vset.pattern.permute.xlu0 2
    %1963 = vperm.xlu0 %1962, %v114
    %v1964 = vpop.permute.xlu0 %1963
    %1966 = vset.pattern.permute.xlu0 2
    %1967 = vperm.xlu0 %1966, %v115
    %v1968 = vpop.permute.xlu0 %1967
    %1970 = vmatpush.msra.mxu0 0.0
    %1971 = vmatpush.msra.mxu0 0.0
    %1972 = vmatpush.msra.mxu0 0.0
    %1973 = vmatpush.msra.mxu0 0.0
    %1974 = vmatpush.msra.mxu0 0.0
    %1975 = vmatpush.msra.mxu0 0.0
    %1976 = vmatpush.msra.mxu0 0.0
    %1977 = vmatpush.msra.mxu0 0.0
    %1978 = vmatpush.msra.mxu0 0.0
    %1979 = vmatpush.msra.mxu0 0.0
    %1980 = vmatpush.msra.mxu0 0.0
    %1981 = vmatpush.msra.mxu0 0.0
    %1982 = vmatpush.msra.mxu0 0.0
    %1983 = vmatpush.msra.mxu0 0.0
    %1984 = vmatpush.msra.mxu0 0.0
    %1985 = vmatpush.msra.mxu0 %v1841
    %1986 = vmatmul.f32.gmra.mxu0 %v278
    %v1987 = vpop.f32.mrf.mxu0
    %v1988 = vadd.f32 %v1844, %v1987
    %1989 = vmatmul.f32.gmra.mxu0 %v281
    %v1990 = vpop.f32.mrf.mxu0
    %v1991 = vadd.f32 %v1848, %v1990
    %1992 = vmatmul.f32.gmra.mxu0 %v284
    %v1993 = vpop.f32.mrf.mxu0
    %v1994 = vadd.f32 %v1852, %v1993
    %1995 = vmatmul.f32.gmra.mxu0 %v287
    %v1996 = vpop.f32.mrf.mxu0
    %v1997 = vadd.f32 %v1856, %v1996
    %1998 = vmatmul.f32.gmra.mxu0 %v290
    %v1999 = vpop.f32.mrf.mxu0
    %v2000 = vadd.f32 %v1860, %v1999
    %2001 = vmatmul.f32.gmra.mxu0 %v293
    %v2002 = vpop.f32.mrf.mxu0
    %v2003 = vadd.f32 %v1864, %v2002
    %2004 = vmatmul.f32.gmra.mxu0 %v296
    %v2005 = vpop.f32.mrf.mxu0
    %v2006 = vadd.f32 %v1868, %v2005
    %2007 = vmatmul.f32.gmra.mxu0 %v299
    %v2008 = vpop.f32.mrf.mxu0
    %v2009 = vadd.f32 %v1872, %v2008
    %2010 = vmatmul.f32.gmra.mxu0 %v302
    %v2011 = vpop.f32.mrf.mxu0
    %v2012 = vadd.f32 %v1876, %v2011
    %2013 = vmatmul.f32.gmra.mxu0 %v305
    %v2014 = vpop.f32.mrf.mxu0
    %v2015 = vadd.f32 %v1880, %v2014
    %2016 = vmatmul.f32.gmra.mxu0 %v308
    %v2017 = vpop.f32.mrf.mxu0
    %v2018 = vadd.f32 %v1884, %v2017
    %2019 = vmatmul.f32.gmra.mxu0 %v311
    %v2020 = vpop.f32.mrf.mxu0
    %v2021 = vadd.f32 %v1888, %v2020
    %2022 = vmatmul.f32.gmra.mxu0 %v314
    %v2023 = vpop.f32.mrf.mxu0
    %v2024 = vadd.f32 %v1892, %v2023
    %2025 = vmatmul.f32.gmra.mxu0 %v317
    %v2026 = vpop.f32.mrf.mxu0
    %v2027 = vadd.f32 %v1896, %v2026
    %2028 = vmatmul.f32.gmra.mxu0 %v320
    %v2029 = vpop.f32.mrf.mxu0
    %v2030 = vadd.f32 %v1900, %v2029
    %2031 = vmatmul.f32.gmra.mxu0 %v323
    %v2032 = vpop.f32.mrf.mxu0
    %v2033 = vadd.f32 %v1904, %v2032
    %2034 = vmatmul.f32.gmra.mxu0 %v326
    %v2035 = vpop.f32.mrf.mxu0
    %v2036 = vadd.f32 %v1908, %v2035
    %2037 = vmatmul.f32.gmra.mxu0 %v329
    %v2038 = vpop.f32.mrf.mxu0
    %v2039 = vadd.f32 %v1912, %v2038
    %2040 = vmatmul.f32.gmra.mxu0 %v332
    %v2041 = vpop.f32.mrf.mxu0
    %v2042 = vadd.f32 %v1916, %v2041
    %2043 = vmatmul.f32.gmra.mxu0 %v335
    %v2044 = vpop.f32.mrf.mxu0
    %v2045 = vadd.f32 %v1920, %v2044
    %2046 = vmatmul.f32.gmra.mxu0 %v338
    %v2047 = vpop.f32.mrf.mxu0
    %v2048 = vadd.f32 %v1924, %v2047
    %2049 = vmatmul.f32.gmra.mxu0 %v341
    %v2050 = vpop.f32.mrf.mxu0
    %v2051 = vadd.f32 %v1928, %v2050
    %2052 = vmatmul.f32.gmra.mxu0 %v344
    %v2053 = vpop.f32.mrf.mxu0
    %v2054 = vadd.f32 %v1932, %v2053
    %2055 = vmatmul.f32.gmra.mxu0 %v347
    %v2056 = vpop.f32.mrf.mxu0
    %v2057 = vadd.f32 %v1936, %v2056
    %2058 = vmatmul.f32.gmra.mxu0 %v350
    %v2059 = vpop.f32.mrf.mxu0
    %v2060 = vadd.f32 %v1940, %v2059
    %2061 = vmatmul.f32.gmra.mxu0 %v353
    %v2062 = vpop.f32.mrf.mxu0
    %v2063 = vadd.f32 %v1944, %v2062
    %2064 = vmatmul.f32.gmra.mxu0 %v356
    %v2065 = vpop.f32.mrf.mxu0
    %v2066 = vadd.f32 %v1948, %v2065
    %2067 = vmatmul.f32.gmra.mxu0 %v359
    %v2068 = vpop.f32.mrf.mxu0
    %v2069 = vadd.f32 %v1952, %v2068
    %2070 = vmatmul.f32.gmra.mxu0 %v362
    %v2071 = vpop.f32.mrf.mxu0
    %v2072 = vadd.f32 %v1956, %v2071
    %2073 = vmatmul.f32.gmra.mxu0 %v365
    %v2074 = vpop.f32.mrf.mxu0
    %v2075 = vadd.f32 %v1960, %v2074
    %2076 = vmatmul.f32.gmra.mxu0 %v368
    %v2077 = vpop.f32.mrf.mxu0
    %v2078 = vadd.f32 %v1964, %v2077
    %2079 = vmatmul.f32.gmra.mxu0 %v371
    %v2080 = vpop.f32.mrf.mxu0
    %v2081 = vadd.f32 %v1968, %v2080
    %2082 = vdwg.mxu0
    %v2083 = vmax.f32 %v1988, 0.0
    %v2084 = vmax.f32 %v1991, 0.0
    %v2085 = vmax.f32 %v1994, 0.0
    %v2086 = vmax.f32 %v1997, 0.0
    %v2087 = vmax.f32 %v2000, 0.0
    %v2088 = vmax.f32 %v2003, 0.0
    %v2089 = vmax.f32 %v2006, 0.0
    %v2090 = vmax.f32 %v2009, 0.0
    %v2091 = vmax.f32 %v2012, 0.0
    %v2092 = vmax.f32 %v2015, 0.0
    %v2093 = vmax.f32 %v2018, 0.0
    %v2094 = vmax.f32 %v2021, 0.0
    %v2095 = vmax.f32 %v2024, 0.0
    %v2096 = vmax.f32 %v2027, 0.0
    %v2097 = vmax.f32 %v2030, 0.0
    %v2098 = vmax.f32 %v2033, 0.0
    %v2099 = vmax.f32 %v2036, 0.0
    %v2100 = vmax.f32 %v2039, 0.0
    %v2101 = vmax.f32 %v2042, 0.0
    %v2102 = vmax.f32 %v2045, 0.0
    %v2103 = vmax.f32 %v2048, 0.0
    %v2104 = vmax.f32 %v2051, 0.0
    %v2105 = vmax.f32 %v2054, 0.0
    %v2106 = vmax.f32 %v2057, 0.0
    %v2107 = vmax.f32 %v2060, 0.0
    %v2108 = vmax.f32 %v2063, 0.0
    %v2109 = vmax.f32 %v2066, 0.0
    %v2110 = vmax.f32 %v2069, 0.0
    %v2111 = vmax.f32 %v2072, 0.0
    %v2112 = vmax.f32 %v2075, 0.0
    %v2113 = vmax.f32 %v2078, 0.0
    %v2114 = vmax.f32 %v2081, 0.0
    %2115 = vmatpush.msra.mxu0 %v2098
    %2116 = vmatpush.msra.mxu0 %v2097
    %2117 = vmatpush.msra.mxu0 %v2096
    %2118 = vmatpush.msra.mxu0 %v2095
    %2119 = vmatpush.msra.mxu0 %v2094
    %2120 = vmatpush.msra.mxu0 %v2093
    %2121 = vmatpush.msra.mxu0 %v2092
    %2122 = vmatpush.msra.mxu0 %v2091
    %2123 = vmatpush.msra.mxu0 %v2090
    %2124 = vmatpush.msra.mxu0 %v2089
    %2125 = vmatpush.msra.mxu0 %v2088
    %2126 = vmatpush.msra.mxu0 %v2087
    %2127 = vmatpush.msra.mxu0 %v2086
    %2128 = vmatpush.msra.mxu0 %v2085
    %2129 = vmatpush.msra.mxu0 %v2084
    %2130 = vmatpush.msra.mxu0 %v2083
    %2131 = vmatmul.f32.gmra.mxu0 %v518
    %v2132 = vpop.f32.mrf.mxu0
    %v2133 = vadd.f32 0.0, %v2132
    %2134 = vdwg.mxu0
    %2135 = vmatpush.msra.mxu0 %v2114
    %2136 = vmatpush.msra.mxu0 %v2113
    %2137 = vmatpush.msra.mxu0 %v2112
    %2138 = vmatpush.msra.mxu0 %v2111
    %2139 = vmatpush.msra.mxu0 %v2110
    %2140 = vmatpush.msra.mxu0 %v2109
    %2141 = vmatpush.msra.mxu0 %v2108
    %2142 = vmatpush.msra.mxu0 %v2107
    %2143 = vmatpush.msra.mxu0 %v2106
    %2144 = vmatpush.msra.mxu0 %v2105
    %2145 = vmatpush.msra.mxu0 %v2104
    %2146 = vmatpush.msra.mxu0 %v2103
    %2147 = vmatpush.msra.mxu0 %v2102
    %2148 = vmatpush.msra.mxu0 %v2101
    %2149 = vmatpush.msra.mxu0 %v2100
    %2150 = vmatpush.msra.mxu0 %v2099
    %2151 = vmatmul.f32.gmra.mxu0 %v519
    %v2152 = vpop.f32.mrf.mxu0
    %v2153 = vadd.f32 %v2133, %v2152
    %2154 = vdwg.mxu0
    %v2155 = vld [vmem:[#allocation5 + $0x10] sm:$0xff]
    %v2156 = vmul.f32 %v1841, 1.0029055
    %v2157 = vmul.f32 %v2153, 0.06181764
    %v2158 = vsub.f32 %v2156, %v2157
    %v2159 = vmul.f32 %v2155, 0.07606389
    %v2160 = vadd.f32 %v2158, %v2159
    %2161 = vset.pattern.permute.xlu0 1
    %2162 = vperm.xlu0 %2161, %v84
    %v2163 = vpop.permute.xlu0 %2162
    %2165 = vset.pattern.permute.xlu0 1
    %2166 = vperm.xlu0 %2165, %v85
    %v2167 = vpop.permute.xlu0 %2166
    %2169 = vset.pattern.permute.xlu0 1
    %2170 = vperm.xlu0 %2169, %v86
    %v2171 = vpop.permute.xlu0 %2170
    %2173 = vset.pattern.permute.xlu0 1
    %2174 = vperm.xlu0 %2173, %v87
    %v2175 = vpop.permute.xlu0 %2174
    %2177 = vset.pattern.permute.xlu0 1
    %2178 = vperm.xlu0 %2177, %v88
    %v2179 = vpop.permute.xlu0 %2178
    %2181 = vset.pattern.permute.xlu0 1
    %2182 = vperm.xlu0 %2181, %v89
    %v2183 = vpop.permute.xlu0 %2182
    %2185 = vset.pattern.permute.xlu0 1
    %2186 = vperm.xlu0 %2185, %v90
    %v2187 = vpop.permute.xlu0 %2186
    %2189 = vset.pattern.permute.xlu0 1
    %2190 = vperm.xlu0 %2189, %v91
    %v2191 = vpop.permute.xlu0 %2190
    %2193 = vset.pattern.permute.xlu0 1
    %2194 = vperm.xlu0 %2193, %v92
    %v2195 = vpop.permute.xlu0 %2194
    %2197 = vset.pattern.permute.xlu0 1
    %2198 = vperm.xlu0 %2197, %v93
    %v2199 = vpop.permute.xlu0 %2198
    %2201 = vset.pattern.permute.xlu0 1
    %2202 = vperm.xlu0 %2201, %v94
    %v2203 = vpop.permute.xlu0 %2202
    %2205 = vset.pattern.permute.xlu0 1
    %2206 = vperm.xlu0 %2205, %v95
    %v2207 = vpop.permute.xlu0 %2206
    %2209 = vset.pattern.permute.xlu0 1
    %2210 = vperm.xlu0 %2209, %v96
    %v2211 = vpop.permute.xlu0 %2210
    %2213 = vset.pattern.permute.xlu0 1
    %2214 = vperm.xlu0 %2213, %v97
    %v2215 = vpop.permute.xlu0 %2214
    %2217 = vset.pattern.permute.xlu0 1
    %2218 = vperm.xlu0 %2217, %v98
    %v2219 = vpop.permute.xlu0 %2218
    %2221 = vset.pattern.permute.xlu0 1
    %2222 = vperm.xlu0 %2221, %v99
    %v2223 = vpop.permute.xlu0 %2222
    %2225 = vset.pattern.permute.xlu0 1
    %2226 = vperm.xlu0 %2225, %v100
    %v2227 = vpop.permute.xlu0 %2226
    %2229 = vset.pattern.permute.xlu0 1
    %2230 = vperm.xlu0 %2229, %v101
    %v2231 = vpop.permute.xlu0 %2230
    %2233 = vset.pattern.permute.xlu0 1
    %2234 = vperm.xlu0 %2233, %v102
    %v2235 = vpop.permute.xlu0 %2234
    %2237 = vset.pattern.permute.xlu0 1
    %2238 = vperm.xlu0 %2237, %v103
    %v2239 = vpop.permute.xlu0 %2238
    %2241 = vset.pattern.permute.xlu0 1
    %2242 = vperm.xlu0 %2241, %v104
    %v2243 = vpop.permute.xlu0 %2242
    %2245 = vset.pattern.permute.xlu0 1
    %2246 = vperm.xlu0 %2245, %v105
    %v2247 = vpop.permute.xlu0 %2246
    %2249 = vset.pattern.permute.xlu0 1
    %2250 = vperm.xlu0 %2249, %v106
    %v2251 = vpop.permute.xlu0 %2250
    %2253 = vset.pattern.permute.xlu0 1
    %2254 = vperm.xlu0 %2253, %v107
    %v2255 = vpop.permute.xlu0 %2254
    %2257 = vset.pattern.permute.xlu0 1
    %2258 = vperm.xlu0 %2257, %v108
    %v2259 = vpop.permute.xlu0 %2258
    %2261 = vset.pattern.permute.xlu0 1
    %2262 = vperm.xlu0 %2261, %v109
    %v2263 = vpop.permute.xlu0 %2262
    %2265 = vset.pattern.permute.xlu0 1
    %2266 = vperm.xlu0 %2265, %v110
    %v2267 = vpop.permute.xlu0 %2266
    %2269 = vset.pattern.permute.xlu0 1
    %2270 = vperm.xlu0 %2269, %v111
    %v2271 = vpop.permute.xlu0 %2270
    %2273 = vset.pattern.permute.xlu0 1
    %2274 = vperm.xlu0 %2273, %v112
    %v2275 = vpop.permute.xlu0 %2274
    %2277 = vset.pattern.permute.xlu0 1
    %2278 = vperm.xlu0 %2277, %v113
    %v2279 = vpop.permute.xlu0 %2278
    %2281 = vset.pattern.permute.xlu0 1
    %2282 = vperm.xlu0 %2281, %v114
    %v2283 = vpop.permute.xlu0 %2282
    %2285 = vset.pattern.permute.xlu0 1
    %2286 = vperm.xlu0 %2285, %v115
    %v2287 = vpop.permute.xlu0 %2286
    %2289 = vmatpush.msra.mxu0 0.0
    %2290 = vmatpush.msra.mxu0 0.0
    %2291 = vmatpush.msra.mxu0 0.0
    %2292 = vmatpush.msra.mxu0 0.0
    %2293 = vmatpush.msra.mxu0 0.0
    %2294 = vmatpush.msra.mxu0 0.0
    %2295 = vmatpush.msra.mxu0 0.0
    %2296 = vmatpush.msra.mxu0 0.0
    %2297 = vmatpush.msra.mxu0 0.0
    %2298 = vmatpush.msra.mxu0 0.0
    %2299 = vmatpush.msra.mxu0 0.0
    %2300 = vmatpush.msra.mxu0 0.0
    %2301 = vmatpush.msra.mxu0 0.0
    %2302 = vmatpush.msra.mxu0 0.0
    %2303 = vmatpush.msra.mxu0 0.0
    %2304 = vmatpush.msra.mxu0 %v2160
    %2305 = vmatmul.f32.gmra.mxu0 %v278
    %v2306 = vpop.f32.mrf.mxu0
    %v2307 = vadd.f32 %v2163, %v2306
    %2308 = vmatmul.f32.gmra.mxu0 %v281
    %v2309 = vpop.f32.mrf.mxu0
    %v2310 = vadd.f32 %v2167, %v2309
    %2311 = vmatmul.f32.gmra.mxu0 %v284
    %v2312 = vpop.f32.mrf.mxu0
    %v2313 = vadd.f32 %v2171, %v2312
    %2314 = vmatmul.f32.gmra.mxu0 %v287
    %v2315 = vpop.f32.mrf.mxu0
    %v2316 = vadd.f32 %v2175, %v2315
    %2317 = vmatmul.f32.gmra.mxu0 %v290
    %v2318 = vpop.f32.mrf.mxu0
    %v2319 = vadd.f32 %v2179, %v2318
    %2320 = vmatmul.f32.gmra.mxu0 %v293
    %v2321 = vpop.f32.mrf.mxu0
    %v2322 = vadd.f32 %v2183, %v2321
    %2323 = vmatmul.f32.gmra.mxu0 %v296
    %v2324 = vpop.f32.mrf.mxu0
    %v2325 = vadd.f32 %v2187, %v2324
    %2326 = vmatmul.f32.gmra.mxu0 %v299
    %v2327 = vpop.f32.mrf.mxu0
    %v2328 = vadd.f32 %v2191, %v2327
    %2329 = vmatmul.f32.gmra.mxu0 %v302
    %v2330 = vpop.f32.mrf.mxu0
    %v2331 = vadd.f32 %v2195, %v2330
    %2332 = vmatmul.f32.gmra.mxu0 %v305
    %v2333 = vpop.f32.mrf.mxu0
    %v2334 = vadd.f32 %v2199, %v2333
    %2335 = vmatmul.f32.gmra.mxu0 %v308
    %v2336 = vpop.f32.mrf.mxu0
    %v2337 = vadd.f32 %v2203, %v2336
    %2338 = vmatmul.f32.gmra.mxu0 %v311
    %v2339 = vpop.f32.mrf.mxu0
    %v2340 = vadd.f32 %v2207, %v2339
    %2341 = vmatmul.f32.gmra.mxu0 %v314
    %v2342 = vpop.f32.mrf.mxu0
    %v2343 = vadd.f32 %v2211, %v2342
    %2344 = vmatmul.f32.gmra.mxu0 %v317
    %v2345 = vpop.f32.mrf.mxu0
    %v2346 = vadd.f32 %v2215, %v2345
    %2347 = vmatmul.f32.gmra.mxu0 %v320
    %v2348 = vpop.f32.mrf.mxu0
    %v2349 = vadd.f32 %v2219, %v2348
    %2350 = vmatmul.f32.gmra.mxu0 %v323
    %v2351 = vpop.f32.mrf.mxu0
    %v2352 = vadd.f32 %v2223, %v2351
    %2353 = vmatmul.f32.gmra.mxu0 %v326
    %v2354 = vpop.f32.mrf.mxu0
    %v2355 = vadd.f32 %v2227, %v2354
    %2356 = vmatmul.f32.gmra.mxu0 %v329
    %v2357 = vpop.f32.mrf.mxu0
    %v2358 = vadd.f32 %v2231, %v2357
    %2359 = vmatmul.f32.gmra.mxu0 %v332
    %v2360 = vpop.f32.mrf.mxu0
    %v2361 = vadd.f32 %v2235, %v2360
    %2362 = vmatmul.f32.gmra.mxu0 %v335
    %v2363 = vpop.f32.mrf.mxu0
    %v2364 = vadd.f32 %v2239, %v2363
    %2365 = vmatmul.f32.gmra.mxu0 %v338
    %v2366 = vpop.f32.mrf.mxu0
    %v2367 = vadd.f32 %v2243, %v2366
    %2368 = vmatmul.f32.gmra.mxu0 %v341
    %v2369 = vpop.f32.mrf.mxu0
    %v2370 = vadd.f32 %v2247, %v2369
    %2371 = vmatmul.f32.gmra.mxu0 %v344
    %v2372 = vpop.f32.mrf.mxu0
    %v2373 = vadd.f32 %v2251, %v2372
    %2374 = vmatmul.f32.gmra.mxu0 %v347
    %v2375 = vpop.f32.mrf.mxu0
    %v2376 = vadd.f32 %v2255, %v2375
    %2377 = vmatmul.f32.gmra.mxu0 %v350
    %v2378 = vpop.f32.mrf.mxu0
    %v2379 = vadd.f32 %v2259, %v2378
    %2380 = vmatmul.f32.gmra.mxu0 %v353
    %v2381 = vpop.f32.mrf.mxu0
    %v2382 = vadd.f32 %v2263, %v2381
    %2383 = vmatmul.f32.gmra.mxu0 %v356
    %v2384 = vpop.f32.mrf.mxu0
    %v2385 = vadd.f32 %v2267, %v2384
    %2386 = vmatmul.f32.gmra.mxu0 %v359
    %v2387 = vpop.f32.mrf.mxu0
    %v2388 = vadd.f32 %v2271, %v2387
    %2389 = vmatmul.f32.gmra.mxu0 %v362
    %v2390 = vpop.f32.mrf.mxu0
    %v2391 = vadd.f32 %v2275, %v2390
    %2392 = vmatmul.f32.gmra.mxu0 %v365
    %v2393 = vpop.f32.mrf.mxu0
    %v2394 = vadd.f32 %v2279, %v2393
    %2395 = vmatmul.f32.gmra.mxu0 %v368
    %v2396 = vpop.f32.mrf.mxu0
    %v2397 = vadd.f32 %v2283, %v2396
    %2398 = vmatmul.f32.gmra.mxu0 %v371
    %v2399 = vpop.f32.mrf.mxu0
    %v2400 = vadd.f32 %v2287, %v2399
    %2401 = vdwg.mxu0
    %v2402 = vmax.f32 %v2307, 0.0
    %v2403 = vmax.f32 %v2310, 0.0
    %v2404 = vmax.f32 %v2313, 0.0
    %v2405 = vmax.f32 %v2316, 0.0
    %v2406 = vmax.f32 %v2319, 0.0
    %v2407 = vmax.f32 %v2322, 0.0
    %v2408 = vmax.f32 %v2325, 0.0
    %v2409 = vmax.f32 %v2328, 0.0
    %v2410 = vmax.f32 %v2331, 0.0
    %v2411 = vmax.f32 %v2334, 0.0
    %v2412 = vmax.f32 %v2337, 0.0
    %v2413 = vmax.f32 %v2340, 0.0
    %v2414 = vmax.f32 %v2343, 0.0
    %v2415 = vmax.f32 %v2346, 0.0
    %v2416 = vmax.f32 %v2349, 0.0
    %v2417 = vmax.f32 %v2352, 0.0
    %v2418 = vmax.f32 %v2355, 0.0
    %v2419 = vmax.f32 %v2358, 0.0
    %v2420 = vmax.f32 %v2361, 0.0
    %v2421 = vmax.f32 %v2364, 0.0
    %v2422 = vmax.f32 %v2367, 0.0
    %v2423 = vmax.f32 %v2370, 0.0
    %v2424 = vmax.f32 %v2373, 0.0
    %v2425 = vmax.f32 %v2376, 0.0
    %v2426 = vmax.f32 %v2379, 0.0
    %v2427 = vmax.f32 %v2382, 0.0
    %v2428 = vmax.f32 %v2385, 0.0
    %v2429 = vmax.f32 %v2388, 0.0
    %v2430 = vmax.f32 %v2391, 0.0
    %v2431 = vmax.f32 %v2394, 0.0
    %v2432 = vmax.f32 %v2397, 0.0
    %v2433 = vmax.f32 %v2400, 0.0
    %2434 = vmatpush.msra.mxu0 %v2417
    %2435 = vmatpush.msra.mxu0 %v2416
    %2436 = vmatpush.msra.mxu0 %v2415
    %2437 = vmatpush.msra.mxu0 %v2414
    %2438 = vmatpush.msra.mxu0 %v2413
    %2439 = vmatpush.msra.mxu0 %v2412
    %2440 = vmatpush.msra.mxu0 %v2411
    %2441 = vmatpush.msra.mxu0 %v2410
    %2442 = vmatpush.msra.mxu0 %v2409
    %2443 = vmatpush.msra.mxu0 %v2408
    %2444 = vmatpush.msra.mxu0 %v2407
    %2445 = vmatpush.msra.mxu0 %v2406
    %2446 = vmatpush.msra.mxu0 %v2405
    %2447 = vmatpush.msra.mxu0 %v2404
    %2448 = vmatpush.msra.mxu0 %v2403
    %2449 = vmatpush.msra.mxu0 %v2402
    %2450 = vmatmul.f32.gmra.mxu0 %v518
    %v2451 = vpop.f32.mrf.mxu0
    %v2452 = vadd.f32 0.0, %v2451
    %2453 = vdwg.mxu0
    %2454 = vmatpush.msra.mxu0 %v2433
    %2455 = vmatpush.msra.mxu0 %v2432
    %2456 = vmatpush.msra.mxu0 %v2431
    %2457 = vmatpush.msra.mxu0 %v2430
    %2458 = vmatpush.msra.mxu0 %v2429
    %2459 = vmatpush.msra.mxu0 %v2428
    %2460 = vmatpush.msra.mxu0 %v2427
    %2461 = vmatpush.msra.mxu0 %v2426
    %2462 = vmatpush.msra.mxu0 %v2425
    %2463 = vmatpush.msra.mxu0 %v2424
    %2464 = vmatpush.msra.mxu0 %v2423
    %2465 = vmatpush.msra.mxu0 %v2422
    %2466 = vmatpush.msra.mxu0 %v2421
    %2467 = vmatpush.msra.mxu0 %v2420
    %2468 = vmatpush.msra.mxu0 %v2419
    %2469 = vmatpush.msra.mxu0 %v2418
    %2470 = vmatmul.f32.gmra.mxu0 %v519
    %v2471 = vpop.f32.mrf.mxu0
    %v2472 = vadd.f32 %v2452, %v2471
    %2473 = vdwg.mxu0
    %v2474 = vld [vmem:[#allocation5 + $0x8] sm:$0xff]
    %v2475 = vmul.f32 %v2160, 1.0014747
    %v2476 = vmul.f32 %v2472, 0.053430516
    %v2477 = vsub.f32 %v2475, %v2476
    %v2478 = vmul.f32 %v2474, 0.054248106
    %v2479 = vadd.f32 %v2477, %v2478
    %2480 = vset.pattern.permute.xlu0 0
    %2481 = vperm.xlu0 %2480, %v84
    %v2482 = vpop.permute.xlu0 %2481
    %2484 = vset.pattern.permute.xlu0 0
    %2485 = vperm.xlu0 %2484, %v85
    %v2486 = vpop.permute.xlu0 %2485
    %2488 = vset.pattern.permute.xlu0 0
    %2489 = vperm.xlu0 %2488, %v86
    %v2490 = vpop.permute.xlu0 %2489
    %2492 = vset.pattern.permute.xlu0 0
    %2493 = vperm.xlu0 %2492, %v87
    %v2494 = vpop.permute.xlu0 %2493
    %2496 = vset.pattern.permute.xlu0 0
    %2497 = vperm.xlu0 %2496, %v88
    %v2498 = vpop.permute.xlu0 %2497
    %2500 = vset.pattern.permute.xlu0 0
    %2501 = vperm.xlu0 %2500, %v89
    %v2502 = vpop.permute.xlu0 %2501
    %2504 = vset.pattern.permute.xlu0 0
    %2505 = vperm.xlu0 %2504, %v90
    %v2506 = vpop.permute.xlu0 %2505
    %2508 = vset.pattern.permute.xlu0 0
    %2509 = vperm.xlu0 %2508, %v91
    %v2510 = vpop.permute.xlu0 %2509
    %2512 = vset.pattern.permute.xlu0 0
    %2513 = vperm.xlu0 %2512, %v92
    %v2514 = vpop.permute.xlu0 %2513
    %2516 = vset.pattern.permute.xlu0 0
    %2517 = vperm.xlu0 %2516, %v93
    %v2518 = vpop.permute.xlu0 %2517
    %2520 = vset.pattern.permute.xlu0 0
    %2521 = vperm.xlu0 %2520, %v94
    %v2522 = vpop.permute.xlu0 %2521
    %2524 = vset.pattern.permute.xlu0 0
    %2525 = vperm.xlu0 %2524, %v95
    %v2526 = vpop.permute.xlu0 %2525
    %2528 = vset.pattern.permute.xlu0 0
    %2529 = vperm.xlu0 %2528, %v96
    %v2530 = vpop.permute.xlu0 %2529
    %2532 = vset.pattern.permute.xlu0 0
    %2533 = vperm.xlu0 %2532, %v97
    %v2534 = vpop.permute.xlu0 %2533
    %2536 = vset.pattern.permute.xlu0 0
    %2537 = vperm.xlu0 %2536, %v98
    %v2538 = vpop.permute.xlu0 %2537
    %2540 = vset.pattern.permute.xlu0 0
    %2541 = vperm.xlu0 %2540, %v99
    %v2542 = vpop.permute.xlu0 %2541
    %2544 = vset.pattern.permute.xlu0 0
    %2545 = vperm.xlu0 %2544, %v100
    %v2546 = vpop.permute.xlu0 %2545
    %2548 = vset.pattern.permute.xlu0 0
    %2549 = vperm.xlu0 %2548, %v101
    %v2550 = vpop.permute.xlu0 %2549
    %2552 = vset.pattern.permute.xlu0 0
    %2553 = vperm.xlu0 %2552, %v102
    %v2554 = vpop.permute.xlu0 %2553
    %2556 = vset.pattern.permute.xlu0 0
    %2557 = vperm.xlu0 %2556, %v103
    %v2558 = vpop.permute.xlu0 %2557
    %2560 = vset.pattern.permute.xlu0 0
    %2561 = vperm.xlu0 %2560, %v104
    %v2562 = vpop.permute.xlu0 %2561
    %2564 = vset.pattern.permute.xlu0 0
    %2565 = vperm.xlu0 %2564, %v105
    %v2566 = vpop.permute.xlu0 %2565
    %2568 = vset.pattern.permute.xlu0 0
    %2569 = vperm.xlu0 %2568, %v106
    %v2570 = vpop.permute.xlu0 %2569
    %2572 = vset.pattern.permute.xlu0 0
    %2573 = vperm.xlu0 %2572, %v107
    %v2574 = vpop.permute.xlu0 %2573
    %2576 = vset.pattern.permute.xlu0 0
    %2577 = vperm.xlu0 %2576, %v108
    %v2578 = vpop.permute.xlu0 %2577
    %2580 = vset.pattern.permute.xlu0 0
    %2581 = vperm.xlu0 %2580, %v109
    %v2582 = vpop.permute.xlu0 %2581
    %2584 = vset.pattern.permute.xlu0 0
    %2585 = vperm.xlu0 %2584, %v110
    %v2586 = vpop.permute.xlu0 %2585
    %2588 = vset.pattern.permute.xlu0 0
    %2589 = vperm.xlu0 %2588, %v111
    %v2590 = vpop.permute.xlu0 %2589
    %2592 = vset.pattern.permute.xlu0 0
    %2593 = vperm.xlu0 %2592, %v112
    %v2594 = vpop.permute.xlu0 %2593
    %2596 = vset.pattern.permute.xlu0 0
    %2597 = vperm.xlu0 %2596, %v113
    %v2598 = vpop.permute.xlu0 %2597
    %2600 = vset.pattern.permute.xlu0 0
    %2601 = vperm.xlu0 %2600, %v114
    %v2602 = vpop.permute.xlu0 %2601
    %2604 = vset.pattern.permute.xlu0 0
    %2605 = vperm.xlu0 %2604, %v115
    %v2606 = vpop.permute.xlu0 %2605
    %2608 = vmatpush.msra.mxu0 0.0
    %2609 = vmatpush.msra.mxu0 0.0
    %2610 = vmatpush.msra.mxu0 0.0
    %2611 = vmatpush.msra.mxu0 0.0
    %2612 = vmatpush.msra.mxu0 0.0
    %2613 = vmatpush.msra.mxu0 0.0
    %2614 = vmatpush.msra.mxu0 0.0
    %2615 = vmatpush.msra.mxu0 0.0
    %2616 = vmatpush.msra.mxu0 0.0
    %2617 = vmatpush.msra.mxu0 0.0
    %2618 = vmatpush.msra.mxu0 0.0
    %2619 = vmatpush.msra.mxu0 0.0
    %2620 = vmatpush.msra.mxu0 0.0
    %2621 = vmatpush.msra.mxu0 0.0
    %2622 = vmatpush.msra.mxu0 0.0
    %2623 = vmatpush.msra.mxu0 %v2479
    %2624 = vmatmul.f32.gmra.mxu0 %v278
    %v2625 = vpop.f32.mrf.mxu0
    %v2626 = vadd.f32 %v2482, %v2625
    %2627 = vmatmul.f32.gmra.mxu0 %v281
    %v2628 = vpop.f32.mrf.mxu0
    %v2629 = vadd.f32 %v2486, %v2628
    %2630 = vmatmul.f32.gmra.mxu0 %v284
    %v2631 = vpop.f32.mrf.mxu0
    %v2632 = vadd.f32 %v2490, %v2631
    %2633 = vmatmul.f32.gmra.mxu0 %v287
    %v2634 = vpop.f32.mrf.mxu0
    %v2635 = vadd.f32 %v2494, %v2634
    %2636 = vmatmul.f32.gmra.mxu0 %v290
    %v2637 = vpop.f32.mrf.mxu0
    %v2638 = vadd.f32 %v2498, %v2637
    %2639 = vmatmul.f32.gmra.mxu0 %v293
    %v2640 = vpop.f32.mrf.mxu0
    %v2641 = vadd.f32 %v2502, %v2640
    %2642 = vmatmul.f32.gmra.mxu0 %v296
    %v2643 = vpop.f32.mrf.mxu0
    %v2644 = vadd.f32 %v2506, %v2643
    %2645 = vmatmul.f32.gmra.mxu0 %v299
    %v2646 = vpop.f32.mrf.mxu0
    %v2647 = vadd.f32 %v2510, %v2646
    %2648 = vmatmul.f32.gmra.mxu0 %v302
    %v2649 = vpop.f32.mrf.mxu0
    %v2650 = vadd.f32 %v2514, %v2649
    %2651 = vmatmul.f32.gmra.mxu0 %v305
    %v2652 = vpop.f32.mrf.mxu0
    %v2653 = vadd.f32 %v2518, %v2652
    %2654 = vmatmul.f32.gmra.mxu0 %v308
    %v2655 = vpop.f32.mrf.mxu0
    %v2656 = vadd.f32 %v2522, %v2655
    %2657 = vmatmul.f32.gmra.mxu0 %v311
    %v2658 = vpop.f32.mrf.mxu0
    %v2659 = vadd.f32 %v2526, %v2658
    %2660 = vmatmul.f32.gmra.mxu0 %v314
    %v2661 = vpop.f32.mrf.mxu0
    %v2662 = vadd.f32 %v2530, %v2661
    %2663 = vmatmul.f32.gmra.mxu0 %v317
    %v2664 = vpop.f32.mrf.mxu0
    %v2665 = vadd.f32 %v2534, %v2664
    %2666 = vmatmul.f32.gmra.mxu0 %v320
    %v2667 = vpop.f32.mrf.mxu0
    %v2668 = vadd.f32 %v2538, %v2667
    %2669 = vmatmul.f32.gmra.mxu0 %v323
    %v2670 = vpop.f32.mrf.mxu0
    %v2671 = vadd.f32 %v2542, %v2670
    %2672 = vmatmul.f32.gmra.mxu0 %v326
    %v2673 = vpop.f32.mrf.mxu0
    %v2674 = vadd.f32 %v2546, %v2673
    %2675 = vmatmul.f32.gmra.mxu0 %v329
    %v2676 = vpop.f32.mrf.mxu0
    %v2677 = vadd.f32 %v2550, %v2676
    %2678 = vmatmul.f32.gmra.mxu0 %v332
    %v2679 = vpop.f32.mrf.mxu0
    %v2680 = vadd.f32 %v2554, %v2679
    %2681 = vmatmul.f32.gmra.mxu0 %v335
    %v2682 = vpop.f32.mrf.mxu0
    %v2683 = vadd.f32 %v2558, %v2682
    %2684 = vmatmul.f32.gmra.mxu0 %v338
    %v2685 = vpop.f32.mrf.mxu0
    %v2686 = vadd.f32 %v2562, %v2685
    %2687 = vmatmul.f32.gmra.mxu0 %v341
    %v2688 = vpop.f32.mrf.mxu0
    %v2689 = vadd.f32 %v2566, %v2688
    %2690 = vmatmul.f32.gmra.mxu0 %v344
    %v2691 = vpop.f32.mrf.mxu0
    %v2692 = vadd.f32 %v2570, %v2691
    %2693 = vmatmul.f32.gmra.mxu0 %v347
    %v2694 = vpop.f32.mrf.mxu0
    %v2695 = vadd.f32 %v2574, %v2694
    %2696 = vmatmul.f32.gmra.mxu0 %v350
    %v2697 = vpop.f32.mrf.mxu0
    %v2698 = vadd.f32 %v2578, %v2697
    %2699 = vmatmul.f32.gmra.mxu0 %v353
    %v2700 = vpop.f32.mrf.mxu0
    %v2701 = vadd.f32 %v2582, %v2700
    %2702 = vmatmul.f32.gmra.mxu0 %v356
    %v2703 = vpop.f32.mrf.mxu0
    %v2704 = vadd.f32 %v2586, %v2703
    %2705 = vmatmul.f32.gmra.mxu0 %v359
    %v2706 = vpop.f32.mrf.mxu0
    %v2707 = vadd.f32 %v2590, %v2706
    %2708 = vmatmul.f32.gmra.mxu0 %v362
    %v2709 = vpop.f32.mrf.mxu0
    %v2710 = vadd.f32 %v2594, %v2709
    %2711 = vmatmul.f32.gmra.mxu0 %v365
    %v2712 = vpop.f32.mrf.mxu0
    %v2713 = vadd.f32 %v2598, %v2712
    %2714 = vmatmul.f32.gmra.mxu0 %v368
    %v2715 = vpop.f32.mrf.mxu0
    %v2716 = vadd.f32 %v2602, %v2715
    %2717 = vmatmul.f32.gmra.mxu0 %v371
    %v2718 = vpop.f32.mrf.mxu0
    %v2719 = vadd.f32 %v2606, %v2718
    %2720 = vdwg.mxu0
    %v2721 = vmax.f32 %v2626, 0.0
    %v2722 = vmax.f32 %v2629, 0.0
    %v2723 = vmax.f32 %v2632, 0.0
    %v2724 = vmax.f32 %v2635, 0.0
    %v2725 = vmax.f32 %v2638, 0.0
    %v2726 = vmax.f32 %v2641, 0.0
    %v2727 = vmax.f32 %v2644, 0.0
    %v2728 = vmax.f32 %v2647, 0.0
    %v2729 = vmax.f32 %v2650, 0.0
    %v2730 = vmax.f32 %v2653, 0.0
    %v2731 = vmax.f32 %v2656, 0.0
    %v2732 = vmax.f32 %v2659, 0.0
    %v2733 = vmax.f32 %v2662, 0.0
    %v2734 = vmax.f32 %v2665, 0.0
    %v2735 = vmax.f32 %v2668, 0.0
    %v2736 = vmax.f32 %v2671, 0.0
    %v2737 = vmax.f32 %v2674, 0.0
    %v2738 = vmax.f32 %v2677, 0.0
    %v2739 = vmax.f32 %v2680, 0.0
    %v2740 = vmax.f32 %v2683, 0.0
    %v2741 = vmax.f32 %v2686, 0.0
    %v2742 = vmax.f32 %v2689, 0.0
    %v2743 = vmax.f32 %v2692, 0.0
    %v2744 = vmax.f32 %v2695, 0.0
    %v2745 = vmax.f32 %v2698, 0.0
    %v2746 = vmax.f32 %v2701, 0.0
    %v2747 = vmax.f32 %v2704, 0.0
    %v2748 = vmax.f32 %v2707, 0.0
    %v2749 = vmax.f32 %v2710, 0.0
    %v2750 = vmax.f32 %v2713, 0.0
    %v2751 = vmax.f32 %v2716, 0.0
    %v2752 = vmax.f32 %v2719, 0.0
    %2753 = vmatpush.msra.mxu0 %v2736
    %2754 = vmatpush.msra.mxu0 %v2735
    %2755 = vmatpush.msra.mxu0 %v2734
    %2756 = vmatpush.msra.mxu0 %v2733
    %2757 = vmatpush.msra.mxu0 %v2732
    %2758 = vmatpush.msra.mxu0 %v2731
    %2759 = vmatpush.msra.mxu0 %v2730
    %2760 = vmatpush.msra.mxu0 %v2729
    %2761 = vmatpush.msra.mxu0 %v2728
    %2762 = vmatpush.msra.mxu0 %v2727
    %2763 = vmatpush.msra.mxu0 %v2726
    %2764 = vmatpush.msra.mxu0 %v2725
    %2765 = vmatpush.msra.mxu0 %v2724
    %2766 = vmatpush.msra.mxu0 %v2723
    %2767 = vmatpush.msra.mxu0 %v2722
    %2768 = vmatpush.msra.mxu0 %v2721
    %2769 = vmatmul.f32.gmra.mxu0 %v518
    %v2770 = vpop.f32.mrf.mxu0
    %v2771 = vadd.f32 0.0, %v2770
    %2772 = vdwg.mxu0
    %2773 = vmatpush.msra.mxu0 %v2752
    %2774 = vmatpush.msra.mxu0 %v2751
    %2775 = vmatpush.msra.mxu0 %v2750
    %2776 = vmatpush.msra.mxu0 %v2749
    %2777 = vmatpush.msra.mxu0 %v2748
    %2778 = vmatpush.msra.mxu0 %v2747
    %2779 = vmatpush.msra.mxu0 %v2746
    %2780 = vmatpush.msra.mxu0 %v2745
    %2781 = vmatpush.msra.mxu0 %v2744
    %2782 = vmatpush.msra.mxu0 %v2743
    %2783 = vmatpush.msra.mxu0 %v2742
    %2784 = vmatpush.msra.mxu0 %v2741
    %2785 = vmatpush.msra.mxu0 %v2740
    %2786 = vmatpush.msra.mxu0 %v2739
    %2787 = vmatpush.msra.mxu0 %v2738
    %2788 = vmatpush.msra.mxu0 %v2737
    %2789 = vmatmul.f32.gmra.mxu0 %v519
    %v2790 = vpop.f32.mrf.mxu0
    %v2791 = vadd.f32 %v2771, %v2790
    %2792 = vdwg.mxu0
    %v2793 = vld [vmem:[#allocation5] sm:$0xff]
    %v2794 = vmul.f32 %v2479, 1.00005
    %v2795 = vmul.f32 %v2791, 0.0100005
    %v2796 = vsub.f32 %v2794, %v2795
    %v2797 = vmul.f32 %v2793, 0.009834784
    %v2798 = vadd.f32 %v2796, %v2797
    %v2799 = vmax.f32 %v2798, -1.0
    %v2800 = vmin.f32 %v2799, 1.0
    %2801 = vst [vmem:[#allocation7] sm:$0xff] %v2800
    // Predicated region
    $region30: #{tpu_custom_call.1} parent=1 // pred_check
      _
    $region31: #{tpu_custom_call.1} parent=1 // pred_check_branch
      %2803 = sbr.rel (0) target = $region33
    $region32: #{tpu_custom_call.1} parent=1 // pred_region
      %2805 = vsyncadd [#allocation4], 0
      %s2807 = sshll.u32 [#allocation7], 4
      %s2808 = int_to_ptr.vmem [resolvable:$true] %s2807
      %s2809 = sshll.u32 %s5, 4
      %s2810 = int_to_ptr.hbm [resolvable:$true] %s2809
      %2812 = dma.vmem_to_hbm [thread:$0]  %s2808, 128, %s2810, [#allocation4]
    $region33: #{tpu_custom_call.1} parent=1 // pred_fallthru
      _
    // Predicated region
    $region34: #{tpu_custom_call.1} parent=1 // pred_check
      _
    $region35: #{tpu_custom_call.1} parent=1 // pred_check_branch
      %2814 = sbr.rel (0) target = $region37
    $region36: #{tpu_custom_call.1} parent=1 // pred_region
      %2816 = dma.done [#allocation4], 128
    $region37: #{tpu_custom_call.1} parent=1 // pred_fallthru
      _
    %2817 = vsyncpa [#allocation3], 1
    %2818 = vsyncpa [#allocation6], 1
    %2819 = vsyncpa [#allocation4], 1

</llo_original>
